<compile_context>
chip_gen: v6e
topology: v6e:2x2x1
jax: 0.10.0
libtpu: 0.0.40
codegen_flags: <defaults>
</compile_context>

<pallas_src>
import functools
import math

import jax
import jax.numpy as jnp
from jax.experimental import pallas as pl
from jax.experimental.pallas import tpu as pltpu


def _layer_norm_f32(v, alpha, bias, eps):
    # PyTorch-module semantics: unbiased std (N-1), divide by (std + eps).
    n = v.shape[-1]
    mean = jnp.mean(v, axis=-1, keepdims=True)
    diff = v - mean
    var = jnp.sum(diff * diff, axis=-1, keepdims=True) * jnp.float32(1.0 / (n - 1))
    std = jnp.sqrt(var)
    inv = pl.reciprocal(std + jnp.float32(eps), approx=False)
    return alpha * diff * inv + bias


def _encoder_layer_kernel(
    x_ref, mask_ref,
    ln1_a_ref, ln1_b_ref,
    wqkv_ref, wo_ref,
    ln2_a_ref, ln2_b_ref,
    w1_ref, b1_ref, w2_ref, b2_ref,
    o_ref,
    *, eps, nhead, head_dim, mask_filler):
    # x_ref: (S, H) f32 for the current batch element; mask_ref: (S, S) int8.
    H = nhead * head_dim
    x = x_ref[...].astype(jnp.float32)

    # ---- sublayer 1: multi-head self-attention on LN1(x), residual add ----
    ln1_a = ln1_a_ref[...].astype(jnp.float32)            # (1, H)
    ln1_b = ln1_b_ref[...].astype(jnp.float32)            # (1, H)
    x_n = _layer_norm_f32(x, ln1_a, ln1_b, eps)           # (S, H) f32

    # Fused QKV projection: one wide MXU matmul (bf16 in, f32 accumulate).
    # wqkv already contains the 1/sqrt(head_dim) scale folded into the Q columns.
    qkv = jnp.dot(x_n.astype(jnp.bfloat16), wqkv_ref[...],
                  preferred_element_type=jnp.float32)      # (S, 3H) f32
    qkv_bf = qkv.astype(jnp.bfloat16)                      # single cast, sliced per head

    # Keep-predicate computed once (hoisted out of the per-head loop); int8 mask,
    # robust '> 0' test instead of float equality with 0.0.
    keep = mask_ref[...].astype(jnp.float32) > jnp.float32(0.0)   # (S, S) bool
    neg_big = jnp.float32(mask_filler)

    ctx_parts = []
    for h in range(nhead):                                 # static unroll (nhead small)
        q_h = qkv_bf[:, h * head_dim:(h + 1) * head_dim]               # (S, hd) bf16
        k_h = qkv_bf[:, H + h * head_dim:H + (h + 1) * head_dim]       # (S, hd) bf16
        v_h = qkv_bf[:, 2 * H + h * head_dim:2 * H + (h + 1) * head_dim]

        # q @ k^T without an explicit transpose; f32 scores out of the MXU.
        scores = jax.lax.dot_general(
            q_h, k_h, (((1,), (1,)), ((), ())),
            preferred_element_type=jnp.float32)                        # (S, S) f32
        scores = jnp.where(keep, scores, neg_big)          # masked_fill semantics

        m = jnp.max(scores, axis=-1, keepdims=True)
        p = jnp.exp(scores - m)
        denom = jnp.sum(p, axis=-1, keepdims=True)
        attn = p * pl.reciprocal(denom, approx=True)       # EUP slot

        ctx_parts.append(jnp.dot(attn.astype(jnp.bfloat16), v_h,
                                 preferred_element_type=jnp.float32))  # (S, hd) f32

    ctx = jnp.concatenate(ctx_parts, axis=-1)              # (S, H) f32
    mha = jnp.dot(ctx.astype(jnp.bfloat16), wo_ref[...],
                  preferred_element_type=jnp.float32)      # single full-depth K=H matmul

    y1 = x + mha                                           # residual 1 (dropout = id)

    # ---- sublayer 2: feed-forward on LN2(y1), residual add ----
    ln2_a = ln2_a_ref[...].astype(jnp.float32)
    ln2_b = ln2_b_ref[...].astype(jnp.float32)
    y1_n = _layer_norm_f32(y1, ln2_a, ln2_b, eps)          # (S, H) f32

    b1 = b1_ref[...].astype(jnp.float32)                   # (1, F)
    b2 = b2_ref[...].astype(jnp.float32)                   # (1, H)

    h1 = jnp.dot(y1_n.astype(jnp.bfloat16), w1_ref[...],
                 preferred_element_type=jnp.float32) + b1  # (S, F) f32
    h1 = jnp.maximum(h1, jnp.float32(0.0))                 # relu
    ffn = jnp.dot(h1.astype(jnp.bfloat16), w2_ref[...],
                  preferred_element_type=jnp.float32) + b2 # (S, H) f32

    o_ref[...] = (y1 + ffn).astype(o_ref.dtype)            # residual 2


def _full_spec(shape):
    n = len(shape)
    return pl.BlockSpec(shape, lambda b, _n=n: (0,) * _n)


def _vmem_limit_bytes():
    # Generation-aware budget: 75% of physical VMEM (v5e/v6e: 128 MiB -> 96 MiB,
    # v7x: 64 MiB -> 48 MiB), leaving headroom for compiler-internal scratch.
    try:
        cap = pltpu.get_tpu_info().vmem_capacity_bytes
    except Exception:
        cap = 64 << 20
    return int(cap * 3 // 4)


def encoder_layer(x, mask, params, *, eps, nhead):
    """x: (B, S, H) f32; mask: (B, S, S) (nonzero = attend, 0 = masked).
    Weights in PyTorch nn.Linear convention: W has shape (out, in), y = x @ W^T (+ b)."""
    B, S, H = x.shape
    hd = H // nhead
    F = params["w1"].shape[0]
    scale = jnp.float32(1.0 / math.sqrt(hd))

    # ---- wrapper-side weight prep (done once, pure layout/dtype work) ----
    # Fused QKV weight (H, 3H) with the score scale folded into the Q part; bf16 for
    # MXU throughput and to halve weight HBM/VMEM traffic.
    wq_t = params["wq"].T.astype(jnp.float32) * scale      # (H, H), scaled
    wk_t = params["wk"].T.astype(jnp.float32)
    wv_t = params["wv"].T.astype(jnp.float32)
    wqkv = jnp.concatenate([wq_t, wk_t, wv_t], axis=1).astype(jnp.bfloat16)  # (H, 3H)
    wo_t = params["wo"].T.astype(jnp.bfloat16)             # (H, H)
    w1_t = params["w1"].T.astype(jnp.bfloat16)             # (H, F)
    w2_t = params["w2"].T.astype(jnp.bfloat16)             # (F, H)

    b1 = params["b1"].reshape(1, F).astype(jnp.float32)
    b2 = params["b2"].reshape(1, H).astype(jnp.float32)
    ln1_a = params["ln1_a"].reshape(1, H).astype(jnp.float32)
    ln1_b = params["ln1_b"].reshape(1, H).astype(jnp.float32)
    ln2_a = params["ln2_a"].reshape(1, H).astype(jnp.float32)
    ln2_b = params["ln2_b"].reshape(1, H).astype(jnp.float32)

    # int8 mask: 4x less HBM traffic / double-buffered VMEM than f32.
    mask_i8 = (mask != 0).astype(jnp.int8)

    kernel = functools.partial(
        _encoder_layer_kernel, eps=eps, nhead=nhead, head_dim=hd, mask_filler=-1e20)

    return pl.pallas_call(
        kernel,
        out_shape=jax.ShapeDtypeStruct((B, S, H), x.dtype),
        grid_spec=pltpu.PrefetchScalarGridSpec(
            num_scalar_prefetch=0,
            grid=(B,),
            in_specs=[
                pl.BlockSpec((None, S, H), lambda b: (b, 0, 0)),   # x, per batch elem
                pl.BlockSpec((None, S, S), lambda b: (b, 0, 0)),   # mask (int8)
                _full_spec((1, H)), _full_spec((1, H)),            # ln1 alpha / bias
                _full_spec((H, 3 * H)),                            # fused Wqkv (bf16)
                _full_spec((H, H)),                                # Wo (bf16)
                _full_spec((1, H)), _full_spec((1, H)),            # ln2 alpha / bias
                _full_spec((H, F)), _full_spec((1, F)),            # W1 (bf16), b1
                _full_spec((F, H)), _full_spec((1, H)),            # W2 (bf16), b2
            ],
            out_specs=pl.BlockSpec((None, S, H), lambda b: (b, 0, 0)),
        ),
        compiler_params=pltpu.CompilerParams(
            dimension_semantics=("parallel",),     # batch shards across v7x's 2 TCs
            vmem_limit_bytes=_vmem_limit_bytes(),
        ),
    )(x, mask_i8, ln1_a, ln1_b, wqkv, wo_t,
      ln2_a, ln2_b, w1_t, b1, w2_t, b2)


# ---------------------------- pure-JAX f32 reference ----------------------------
def encoder_layer_ref(x, mask, p, *, eps, nhead):
    B, S, H = x.shape
    hd = H // nhead

    def ln(v, a, b):
        mean = v.mean(-1, keepdims=True)
        std = jnp.sqrt(((v - mean) ** 2).sum(-1, keepdims=True) / (H - 1))
        return a * (v - mean) / (std + eps) + b

    xn = ln(x, p["ln1_a"], p["ln1_b"])
    q = xn @ p["wq"].T
    k = xn @ p["wk"].T
    v = xn @ p["wv"].T
    q = q.reshape(B, S, nhead, hd).transpose(0, 2, 1, 3)
    k = k.reshape(B, S, nhead, hd).transpose(0, 2, 1, 3)
    v = v.reshape(B, S, nhead, hd).transpose(0, 2, 1, 3)
    scores = (q @ jnp.swapaxes(k, -1, -2)) / math.sqrt(hd)
    scores = jnp.where(mask[:, None, :, :] == 0, -1e20, scores)     # mask.unsqueeze(1)
    attn = jax.nn.softmax(scores, axis=-1)
    ctx = (attn @ v).transpose(0, 2, 1, 3).reshape(B, S, H)
    mha = ctx @ p["wo"].T
    y1 = x + mha
    y1n = ln(y1, p["ln2_a"], p["ln2_b"])
    h1 = jnp.maximum(y1n @ p["w1"].T + p["b1"], 0.0)
    ffn = h1 @ p["w2"].T + p["b2"]
    return y1 + ffn


if __name__ == "__main__":
    # EncoderLayer demo shapes: batch=2, seq=8, d_model=32, nhead=4, dim_feedforward=64
    B, S, H, NHEAD, F = 2, 8, 32, 4, 64
    EPS = 1e-6

    key = jax.random.PRNGKey(0)
    ks = jax.random.split(key, 10)
    x = jax.random.normal(ks[0], (B, S, H), dtype=jnp.float32)

    params = {
        # attention projections (nn.Linear(d_model, d_model, bias=False): W is (out, in))
        "wq": 0.1 * jax.random.normal(ks[1], (H, H), dtype=jnp.float32),
        "wk": 0.1 * jax.random.normal(ks[2], (H, H), dtype=jnp.float32),
        "wv": 0.1 * jax.random.normal(ks[3], (H, H), dtype=jnp.float32),
        "wo": 0.1 * jax.random.normal(ks[4], (H, H), dtype=jnp.float32),
        # feed-forward (nn.Linear convention: W is (out, in))
        "w1": 0.1 * jax.random.normal(ks[5], (F, H), dtype=jnp.float32),
        "b1": 0.1 * jax.random.normal(ks[6], (F,), dtype=jnp.float32),
        "w2": 0.1 * jax.random.normal(ks[7], (H, F), dtype=jnp.float32),
        "b2": 0.1 * jax.random.normal(ks[8], (H,), dtype=jnp.float32),
        # LayerNorm parameters (init matches nn.Parameter(ones / zeros))
        "ln1_a": jnp.ones((H,), jnp.float32), "ln1_b": jnp.zeros((H,), jnp.float32),
        "ln2_a": jnp.ones((H,), jnp.float32), "ln2_b": jnp.zeros((H,), jnp.float32),
    }

    # Attention mask (1 = attend, 0 = masked); batch element 1 masks its last two keys.
    mask = jnp.ones((B, S, S), dtype=jnp.float32)
    mask = mask.at[1, :, S - 2:].set(0.0)

    out = encoder_layer(x, mask, params, eps=EPS, nhead=NHEAD)
    jax.block_until_ready(out)

    ref = encoder_layer_ref(x, mask, params, eps=EPS, nhead=NHEAD)
    assert out.shape == ref.shape
    # Tolerance accounts for bf16 MXU inputs (f32 accumulate) + approx softmax reciprocal.
    assert jnp.allclose(out, ref, atol=3e-2, rtol=3e-2), "mismatch vs reference"

    print("KERNEL_OK")
</pallas_src>

<mosaic_0001>
module attributes {stable_mosaic.version = 11 : i64} {
  func.func @_encoder_layer_kernel(%arg0: i32, %arg1: memref<1x8x32xf32, #tpu.memory_space<vmem>>, %arg2: memref<1x8x8xi8, #tpu.memory_space<vmem>>, %arg3: memref<1x32xf32, #tpu.memory_space<vmem>>, %arg4: memref<1x32xf32, #tpu.memory_space<vmem>>, %arg5: memref<32x96xbf16, #tpu.memory_space<vmem>>, %arg6: memref<32x32xbf16, #tpu.memory_space<vmem>>, %arg7: memref<1x32xf32, #tpu.memory_space<vmem>>, %arg8: memref<1x32xf32, #tpu.memory_space<vmem>>, %arg9: memref<32x64xbf16, #tpu.memory_space<vmem>>, %arg10: memref<1x64xf32, #tpu.memory_space<vmem>>, %arg11: memref<64x32xbf16, #tpu.memory_space<vmem>>, %arg12: memref<1x32xf32, #tpu.memory_space<vmem>>, %arg13: memref<1x8x32xf32, #tpu.memory_space<vmem>>) attributes {dimension_semantics = [#tpu.dimension_semantics<parallel>], iteration_bounds = array<i64: 2>, scalar_prefetch = 0 : i64, scratch_operands = 0 : i64, tpu.core_type = #tpu.core_type<tc>, window_params = [{transform_indices = @transform_0, window_bounds = array<i64: 1, 8, 32>}, {transform_indices = @transform_1, window_bounds = array<i64: 1, 8, 8>}, {pipeline_mode = #tpu.pipeline_mode<synchronous>, transform_indices = @transform_2, window_bounds = array<i64: 1, 32>}, {pipeline_mode = #tpu.pipeline_mode<synchronous>, transform_indices = @transform_3, window_bounds = array<i64: 1, 32>}, {pipeline_mode = #tpu.pipeline_mode<synchronous>, transform_indices = @transform_4, window_bounds = array<i64: 32, 96>}, {pipeline_mode = #tpu.pipeline_mode<synchronous>, transform_indices = @transform_5, window_bounds = array<i64: 32, 32>}, {pipeline_mode = #tpu.pipeline_mode<synchronous>, transform_indices = @transform_6, window_bounds = array<i64: 1, 32>}, {pipeline_mode = #tpu.pipeline_mode<synchronous>, transform_indices = @transform_7, window_bounds = array<i64: 1, 32>}, {pipeline_mode = #tpu.pipeline_mode<synchronous>, transform_indices = @transform_8, window_bounds = array<i64: 32, 64>}, {pipeline_mode = #tpu.pipeline_mode<synchronous>, transform_indices = @transform_9, window_bounds = array<i64: 1, 64>}, {pipeline_mode = #tpu.pipeline_mode<synchronous>, transform_indices = @transform_10, window_bounds = array<i64: 64, 32>}, {pipeline_mode = #tpu.pipeline_mode<synchronous>, transform_indices = @transform_11, window_bounds = array<i64: 1, 32>}, {transform_indices = @transform_12, window_bounds = array<i64: 1, 8, 32>}]} {
    %c0 = arith.constant 0 : index
    %c0_0 = arith.constant 0 : index
    %c0_1 = arith.constant 0 : index
    %0 = vector.load %arg1[%c0, %c0_0, %c0_1] : memref<1x8x32xf32, #tpu.memory_space<vmem>>, vector<1x8x32xf32>
    %1 = vector.shape_cast %0 : vector<1x8x32xf32> to vector<8x32xf32>
    %c0_2 = arith.constant 0 : index
    %c0_3 = arith.constant 0 : index
    %2 = vector.load %arg3[%c0_2, %c0_3] : memref<1x32xf32, #tpu.memory_space<vmem>>, vector<1x32xf32>
    %c0_4 = arith.constant 0 : index
    %c0_5 = arith.constant 0 : index
    %3 = vector.load %arg4[%c0_4, %c0_5] : memref<1x32xf32, #tpu.memory_space<vmem>>, vector<1x32xf32>
    %cst = arith.constant dense<0.000000e+00> : vector<8xf32>
    %4 = vector.multi_reduction <add>, %1, %cst [1] : vector<8x32xf32> to vector<8xf32>
    %5 = vector.shape_cast %4 : vector<8xf32> to vector<8x1xf32>
    %cst_6 = arith.constant 3.200000e+01 : f32
    %6 = vector.broadcast %cst_6 : f32 to vector<8x1xf32>
    %7 = arith.divf %5, %6 : vector<8x1xf32>
    %8 = vector.broadcast %7 : vector<8x1xf32> to vector<8x32xf32>
    %9 = arith.subf %1, %8 : vector<8x32xf32>
    %10 = arith.mulf %9, %9 : vector<8x32xf32>
    %cst_7 = arith.constant dense<0.000000e+00> : vector<8xf32>
    %11 = vector.multi_reduction <add>, %10, %cst_7 [1] : vector<8x32xf32> to vector<8xf32>
    %12 = vector.shape_cast %11 : vector<8xf32> to vector<8x1xf32>
    %cst_8 = arith.constant 0.0322580636 : f32
    %13 = vector.broadcast %cst_8 : f32 to vector<8x1xf32>
    %14 = arith.mulf %12, %13 : vector<8x1xf32>
    %15 = math.sqrt %14 : vector<8x1xf32>
    %cst_9 = arith.constant 9.99999997E-7 : f32
    %16 = vector.broadcast %cst_9 : f32 to vector<8x1xf32>
    %17 = arith.addf %15, %16 : vector<8x1xf32>
    %18 = tpu.reciprocal %17 : vector<8x1xf32> -> vector<8x1xf32>
    %19 = vector.broadcast %2 : vector<1x32xf32> to vector<8x32xf32>
    %20 = arith.mulf %19, %9 : vector<8x32xf32>
    %21 = vector.broadcast %18 : vector<8x1xf32> to vector<8x32xf32>
    %22 = arith.mulf %20, %21 : vector<8x32xf32>
    %23 = vector.broadcast %3 : vector<1x32xf32> to vector<8x32xf32>
    %24 = arith.addf %22, %23 : vector<8x32xf32>
    %25 = arith.truncf %24 : vector<8x32xf32> to vector<8x32xbf16>
    %c0_10 = arith.constant 0 : index
    %c0_11 = arith.constant 0 : index
    %26 = vector.load %arg5[%c0_10, %c0_11] : memref<32x96xbf16, #tpu.memory_space<vmem>>, vector<32x96xbf16>
    %cst_12 = arith.constant dense<0.000000e+00> : vector<8x96xf32>
    %27 = tpu.matmul %25, %26, %cst_12 {dimension_numbers = #tpu.dot_dimension_numbers<[1], [0], [0], [1], [0, 0, 1, 1], [], []>} : vector<8x32xbf16>, vector<32x96xbf16>, vector<8x96xf32> -> vector<8x96xf32>
    %28 = arith.truncf %27 : vector<8x96xf32> to vector<8x96xbf16>
    %c0_13 = arith.constant 0 : index
    %c0_14 = arith.constant 0 : index
    %c0_15 = arith.constant 0 : index
    %29 = vector.load %arg2[%c0_13, %c0_14, %c0_15] : memref<1x8x8xi8, #tpu.memory_space<vmem>>, vector<1x8x8xi8>
    %30 = vector.shape_cast %29 : vector<1x8x8xi8> to vector<8x8xi8>
    %31 = arith.sitofp %30 : vector<8x8xi8> to vector<8x8xf32>
    %cst_16 = arith.constant 0.000000e+00 : f32
    %32 = vector.broadcast %cst_16 : f32 to vector<8x8xf32>
    %33 = arith.cmpf ogt, %31, %32 : vector<8x8xf32>
    %34 = vector.extract_strided_slice %28 {offsets = [0, 0], sizes = [8, 8], strides = [1, 1]} : vector<8x96xbf16> to vector<8x8xbf16>
    %35 = vector.extract_strided_slice %28 {offsets = [0, 32], sizes = [8, 8], strides = [1, 1]} : vector<8x96xbf16> to vector<8x8xbf16>
    %36 = vector.extract_strided_slice %28 {offsets = [0, 64], sizes = [8, 8], strides = [1, 1]} : vector<8x96xbf16> to vector<8x8xbf16>
    %cst_17 = arith.constant dense<0.000000e+00> : vector<8x8xf32>
    %37 = tpu.matmul %34, %35, %cst_17 {dimension_numbers = #tpu.dot_dimension_numbers<[1], [1], [0], [0], [0, 0, 1, 0], [], []>} : vector<8x8xbf16>, vector<8x8xbf16>, vector<8x8xf32> -> vector<8x8xf32>
    %cst_18 = arith.constant -1.000000e+20 : f32
    %38 = vector.broadcast %cst_18 : f32 to vector<8x8xf32>
    %39 = arith.select %33, %37, %38 : vector<8x8xi1>, vector<8x8xf32>
    %cst_19 = arith.constant dense<0xFF800000> : vector<8xf32>
    %40 = vector.multi_reduction <maximumf>, %39, %cst_19 [1] : vector<8x8xf32> to vector<8xf32>
    %41 = vector.shape_cast %40 : vector<8xf32> to vector<8x1xf32>
    %42 = vector.broadcast %41 : vector<8x1xf32> to vector<8x8xf32>
    %43 = arith.subf %39, %42 : vector<8x8xf32>
    %44 = math.exp %43 : vector<8x8xf32>
    %cst_20 = arith.constant dense<0.000000e+00> : vector<8xf32>
    %45 = vector.multi_reduction <add>, %44, %cst_20 [1] : vector<8x8xf32> to vector<8xf32>
    %46 = vector.shape_cast %45 : vector<8xf32> to vector<8x1xf32>
    %47 = tpu.reciprocal %46 {approx = true} : vector<8x1xf32> -> vector<8x1xf32>
    %48 = vector.broadcast %47 : vector<8x1xf32> to vector<8x8xf32>
    %49 = arith.mulf %44, %48 : vector<8x8xf32>
    %50 = arith.truncf %49 : vector<8x8xf32> to vector<8x8xbf16>
    %cst_21 = arith.constant dense<0.000000e+00> : vector<8x8xf32>
    %51 = tpu.matmul %50, %36, %cst_21 {dimension_numbers = #tpu.dot_dimension_numbers<[1], [0], [0], [1], [0, 0, 1, 1], [], []>} : vector<8x8xbf16>, vector<8x8xbf16>, vector<8x8xf32> -> vector<8x8xf32>
    %52 = vector.extract_strided_slice %28 {offsets = [0, 8], sizes = [8, 8], strides = [1, 1]} : vector<8x96xbf16> to vector<8x8xbf16>
    %53 = vector.extract_strided_slice %28 {offsets = [0, 40], sizes = [8, 8], strides = [1, 1]} : vector<8x96xbf16> to vector<8x8xbf16>
    %54 = vector.extract_strided_slice %28 {offsets = [0, 72], sizes = [8, 8], strides = [1, 1]} : vector<8x96xbf16> to vector<8x8xbf16>
    %cst_22 = arith.constant dense<0.000000e+00> : vector<8x8xf32>
    %55 = tpu.matmul %52, %53, %cst_22 {dimension_numbers = #tpu.dot_dimension_numbers<[1], [1], [0], [0], [0, 0, 1, 0], [], []>} : vector<8x8xbf16>, vector<8x8xbf16>, vector<8x8xf32> -> vector<8x8xf32>
    %cst_23 = arith.constant -1.000000e+20 : f32
    %56 = vector.broadcast %cst_23 : f32 to vector<8x8xf32>
    %57 = arith.select %33, %55, %56 : vector<8x8xi1>, vector<8x8xf32>
    %cst_24 = arith.constant dense<0xFF800000> : vector<8xf32>
    %58 = vector.multi_reduction <maximumf>, %57, %cst_24 [1] : vector<8x8xf32> to vector<8xf32>
    %59 = vector.shape_cast %58 : vector<8xf32> to vector<8x1xf32>
    %60 = vector.broadcast %59 : vector<8x1xf32> to vector<8x8xf32>
    %61 = arith.subf %57, %60 : vector<8x8xf32>
    %62 = math.exp %61 : vector<8x8xf32>
    %cst_25 = arith.constant dense<0.000000e+00> : vector<8xf32>
    %63 = vector.multi_reduction <add>, %62, %cst_25 [1] : vector<8x8xf32> to vector<8xf32>
    %64 = vector.shape_cast %63 : vector<8xf32> to vector<8x1xf32>
    %65 = tpu.reciprocal %64 {approx = true} : vector<8x1xf32> -> vector<8x1xf32>
    %66 = vector.broadcast %65 : vector<8x1xf32> to vector<8x8xf32>
    %67 = arith.mulf %62, %66 : vector<8x8xf32>
    %68 = arith.truncf %67 : vector<8x8xf32> to vector<8x8xbf16>
    %cst_26 = arith.constant dense<0.000000e+00> : vector<8x8xf32>
    %69 = tpu.matmul %68, %54, %cst_26 {dimension_numbers = #tpu.dot_dimension_numbers<[1], [0], [0], [1], [0, 0, 1, 1], [], []>} : vector<8x8xbf16>, vector<8x8xbf16>, vector<8x8xf32> -> vector<8x8xf32>
    %70 = vector.extract_strided_slice %28 {offsets = [0, 16], sizes = [8, 8], strides = [1, 1]} : vector<8x96xbf16> to vector<8x8xbf16>
    %71 = vector.extract_strided_slice %28 {offsets = [0, 48], sizes = [8, 8], strides = [1, 1]} : vector<8x96xbf16> to vector<8x8xbf16>
    %72 = vector.extract_strided_slice %28 {offsets = [0, 80], sizes = [8, 8], strides = [1, 1]} : vector<8x96xbf16> to vector<8x8xbf16>
    %cst_27 = arith.constant dense<0.000000e+00> : vector<8x8xf32>
    %73 = tpu.matmul %70, %71, %cst_27 {dimension_numbers = #tpu.dot_dimension_numbers<[1], [1], [0], [0], [0, 0, 1, 0], [], []>} : vector<8x8xbf16>, vector<8x8xbf16>, vector<8x8xf32> -> vector<8x8xf32>
    %cst_28 = arith.constant -1.000000e+20 : f32
    %74 = vector.broadcast %cst_28 : f32 to vector<8x8xf32>
    %75 = arith.select %33, %73, %74 : vector<8x8xi1>, vector<8x8xf32>
    %cst_29 = arith.constant dense<0xFF800000> : vector<8xf32>
    %76 = vector.multi_reduction <maximumf>, %75, %cst_29 [1] : vector<8x8xf32> to vector<8xf32>
    %77 = vector.shape_cast %76 : vector<8xf32> to vector<8x1xf32>
    %78 = vector.broadcast %77 : vector<8x1xf32> to vector<8x8xf32>
    %79 = arith.subf %75, %78 : vector<8x8xf32>
    %80 = math.exp %79 : vector<8x8xf32>
    %cst_30 = arith.constant dense<0.000000e+00> : vector<8xf32>
    %81 = vector.multi_reduction <add>, %80, %cst_30 [1] : vector<8x8xf32> to vector<8xf32>
    %82 = vector.shape_cast %81 : vector<8xf32> to vector<8x1xf32>
    %83 = tpu.reciprocal %82 {approx = true} : vector<8x1xf32> -> vector<8x1xf32>
    %84 = vector.broadcast %83 : vector<8x1xf32> to vector<8x8xf32>
    %85 = arith.mulf %80, %84 : vector<8x8xf32>
    %86 = arith.truncf %85 : vector<8x8xf32> to vector<8x8xbf16>
    %cst_31 = arith.constant dense<0.000000e+00> : vector<8x8xf32>
    %87 = tpu.matmul %86, %72, %cst_31 {dimension_numbers = #tpu.dot_dimension_numbers<[1], [0], [0], [1], [0, 0, 1, 1], [], []>} : vector<8x8xbf16>, vector<8x8xbf16>, vector<8x8xf32> -> vector<8x8xf32>
    %88 = vector.extract_strided_slice %28 {offsets = [0, 24], sizes = [8, 8], strides = [1, 1]} : vector<8x96xbf16> to vector<8x8xbf16>
    %89 = vector.extract_strided_slice %28 {offsets = [0, 56], sizes = [8, 8], strides = [1, 1]} : vector<8x96xbf16> to vector<8x8xbf16>
    %90 = vector.extract_strided_slice %28 {offsets = [0, 88], sizes = [8, 8], strides = [1, 1]} : vector<8x96xbf16> to vector<8x8xbf16>
    %cst_32 = arith.constant dense<0.000000e+00> : vector<8x8xf32>
    %91 = tpu.matmul %88, %89, %cst_32 {dimension_numbers = #tpu.dot_dimension_numbers<[1], [1], [0], [0], [0, 0, 1, 0], [], []>} : vector<8x8xbf16>, vector<8x8xbf16>, vector<8x8xf32> -> vector<8x8xf32>
    %cst_33 = arith.constant -1.000000e+20 : f32
    %92 = vector.broadcast %cst_33 : f32 to vector<8x8xf32>
    %93 = arith.select %33, %91, %92 : vector<8x8xi1>, vector<8x8xf32>
    %cst_34 = arith.constant dense<0xFF800000> : vector<8xf32>
    %94 = vector.multi_reduction <maximumf>, %93, %cst_34 [1] : vector<8x8xf32> to vector<8xf32>
    %95 = vector.shape_cast %94 : vector<8xf32> to vector<8x1xf32>
    %96 = vector.broadcast %95 : vector<8x1xf32> to vector<8x8xf32>
    %97 = arith.subf %93, %96 : vector<8x8xf32>
    %98 = math.exp %97 : vector<8x8xf32>
    %cst_35 = arith.constant dense<0.000000e+00> : vector<8xf32>
    %99 = vector.multi_reduction <add>, %98, %cst_35 [1] : vector<8x8xf32> to vector<8xf32>
    %100 = vector.shape_cast %99 : vector<8xf32> to vector<8x1xf32>
    %101 = tpu.reciprocal %100 {approx = true} : vector<8x1xf32> -> vector<8x1xf32>
    %102 = vector.broadcast %101 : vector<8x1xf32> to vector<8x8xf32>
    %103 = arith.mulf %98, %102 : vector<8x8xf32>
    %104 = arith.truncf %103 : vector<8x8xf32> to vector<8x8xbf16>
    %cst_36 = arith.constant dense<0.000000e+00> : vector<8x8xf32>
    %105 = tpu.matmul %104, %90, %cst_36 {dimension_numbers = #tpu.dot_dimension_numbers<[1], [0], [0], [1], [0, 0, 1, 1], [], []>} : vector<8x8xbf16>, vector<8x8xbf16>, vector<8x8xf32> -> vector<8x8xf32>
    %106 = tpu.concatenate %51, %69, %87, %105 in 1 : vector<8x8xf32>, vector<8x8xf32>, vector<8x8xf32>, vector<8x8xf32> -> vector<8x32xf32>
    %107 = arith.truncf %106 : vector<8x32xf32> to vector<8x32xbf16>
    %c0_37 = arith.constant 0 : index
    %c0_38 = arith.constant 0 : index
    %108 = vector.load %arg6[%c0_37, %c0_38] : memref<32x32xbf16, #tpu.memory_space<vmem>>, vector<32x32xbf16>
    %cst_39 = arith.constant dense<0.000000e+00> : vector<8x32xf32>
    %109 = tpu.matmul %107, %108, %cst_39 {dimension_numbers = #tpu.dot_dimension_numbers<[1], [0], [0], [1], [0, 0, 1, 1], [], []>} : vector<8x32xbf16>, vector<32x32xbf16>, vector<8x32xf32> -> vector<8x32xf32>
    %110 = arith.addf %1, %109 : vector<8x32xf32>
    %c0_40 = arith.constant 0 : index
    %c0_41 = arith.constant 0 : index
    %111 = vector.load %arg7[%c0_40, %c0_41] : memref<1x32xf32, #tpu.memory_space<vmem>>, vector<1x32xf32>
    %c0_42 = arith.constant 0 : index
    %c0_43 = arith.constant 0 : index
    %112 = vector.load %arg8[%c0_42, %c0_43] : memref<1x32xf32, #tpu.memory_space<vmem>>, vector<1x32xf32>
    %cst_44 = arith.constant dense<0.000000e+00> : vector<8xf32>
    %113 = vector.multi_reduction <add>, %110, %cst_44 [1] : vector<8x32xf32> to vector<8xf32>
    %114 = vector.shape_cast %113 : vector<8xf32> to vector<8x1xf32>
    %cst_45 = arith.constant 3.200000e+01 : f32
    %115 = vector.broadcast %cst_45 : f32 to vector<8x1xf32>
    %116 = arith.divf %114, %115 : vector<8x1xf32>
    %117 = vector.broadcast %116 : vector<8x1xf32> to vector<8x32xf32>
    %118 = arith.subf %110, %117 : vector<8x32xf32>
    %119 = arith.mulf %118, %118 : vector<8x32xf32>
    %cst_46 = arith.constant dense<0.000000e+00> : vector<8xf32>
    %120 = vector.multi_reduction <add>, %119, %cst_46 [1] : vector<8x32xf32> to vector<8xf32>
    %121 = vector.shape_cast %120 : vector<8xf32> to vector<8x1xf32>
    %cst_47 = arith.constant 0.0322580636 : f32
    %122 = vector.broadcast %cst_47 : f32 to vector<8x1xf32>
    %123 = arith.mulf %121, %122 : vector<8x1xf32>
    %124 = math.sqrt %123 : vector<8x1xf32>
    %cst_48 = arith.constant 9.99999997E-7 : f32
    %125 = vector.broadcast %cst_48 : f32 to vector<8x1xf32>
    %126 = arith.addf %124, %125 : vector<8x1xf32>
    %127 = tpu.reciprocal %126 : vector<8x1xf32> -> vector<8x1xf32>
    %128 = vector.broadcast %111 : vector<1x32xf32> to vector<8x32xf32>
    %129 = arith.mulf %128, %118 : vector<8x32xf32>
    %130 = vector.broadcast %127 : vector<8x1xf32> to vector<8x32xf32>
    %131 = arith.mulf %129, %130 : vector<8x32xf32>
    %132 = vector.broadcast %112 : vector<1x32xf32> to vector<8x32xf32>
    %133 = arith.addf %131, %132 : vector<8x32xf32>
    %c0_49 = arith.constant 0 : index
    %c0_50 = arith.constant 0 : index
    %134 = vector.load %arg10[%c0_49, %c0_50] : memref<1x64xf32, #tpu.memory_space<vmem>>, vector<1x64xf32>
    %c0_51 = arith.constant 0 : index
    %c0_52 = arith.constant 0 : index
    %135 = vector.load %arg12[%c0_51, %c0_52] : memref<1x32xf32, #tpu.memory_space<vmem>>, vector<1x32xf32>
    %136 = arith.truncf %133 : vector<8x32xf32> to vector<8x32xbf16>
    %c0_53 = arith.constant 0 : index
    %c0_54 = arith.constant 0 : index
    %137 = vector.load %arg9[%c0_53, %c0_54] : memref<32x64xbf16, #tpu.memory_space<vmem>>, vector<32x64xbf16>
    %cst_55 = arith.constant dense<0.000000e+00> : vector<8x64xf32>
    %138 = tpu.matmul %136, %137, %cst_55 {dimension_numbers = #tpu.dot_dimension_numbers<[1], [0], [0], [1], [0, 0, 1, 1], [], []>} : vector<8x32xbf16>, vector<32x64xbf16>, vector<8x64xf32> -> vector<8x64xf32>
    %139 = vector.broadcast %134 : vector<1x64xf32> to vector<8x64xf32>
    %140 = arith.addf %138, %139 : vector<8x64xf32>
    %cst_56 = arith.constant 0.000000e+00 : f32
    %141 = vector.broadcast %cst_56 : f32 to vector<8x64xf32>
    %142 = arith.maximumf %140, %141 : vector<8x64xf32>
    %143 = arith.truncf %142 : vector<8x64xf32> to vector<8x64xbf16>
    %c0_57 = arith.constant 0 : index
    %c0_58 = arith.constant 0 : index
    %144 = vector.load %arg11[%c0_57, %c0_58] : memref<64x32xbf16, #tpu.memory_space<vmem>>, vector<64x32xbf16>
    %cst_59 = arith.constant dense<0.000000e+00> : vector<8x32xf32>
    %145 = tpu.matmul %143, %144, %cst_59 {dimension_numbers = #tpu.dot_dimension_numbers<[1], [0], [0], [1], [0, 0, 1, 1], [], []>} : vector<8x64xbf16>, vector<64x32xbf16>, vector<8x32xf32> -> vector<8x32xf32>
    %146 = vector.broadcast %135 : vector<1x32xf32> to vector<8x32xf32>
    %147 = arith.addf %145, %146 : vector<8x32xf32>
    %148 = arith.addf %110, %147 : vector<8x32xf32>
    %c0_60 = arith.constant 0 : index
    %c0_61 = arith.constant 0 : index
    %c0_62 = arith.constant 0 : index
    %149 = vector.load %arg13[%c0_60, %c0_61, %c0_62] : memref<1x8x32xf32, #tpu.memory_space<vmem>>, vector<1x8x32xf32>
    %150 = vector.shape_cast %149 : vector<1x8x32xf32> to vector<8x32xf32>
    %151 = vector.shape_cast %148 : vector<8x32xf32> to vector<1x8x32xf32>
    tpu.vector_store %arg13[%c0_60, %c0_61, %c0_62], %151 {strides = array<i32>} : memref<1x8x32xf32, #tpu.memory_space<vmem>>, vector<1x8x32xf32>,
    return
  }
  func.func @transform_0(%arg0: i32) -> (i32, i32, i32) {
    %c0_i32 = arith.constant 0 : i32
    %c0_i32_0 = arith.constant 0 : i32
    %c0_i32_1 = arith.constant 0 : i32
    return %arg0, %c0_i32, %c0_i32_0 : i32, i32, i32
  }
  func.func @transform_1(%arg0: i32) -> (i32, i32, i32) {
    %c0_i32 = arith.constant 0 : i32
    %c0_i32_0 = arith.constant 0 : i32
    %c0_i32_1 = arith.constant 0 : i32
    return %arg0, %c0_i32, %c0_i32_0 : i32, i32, i32
  }
  func.func @transform_2(%arg0: i32) -> (i32, i32) {
    %c0_i32 = arith.constant 0 : i32
    %c0_i32_0 = arith.constant 0 : i32
    %c0_i32_1 = arith.constant 0 : i32
    return %c0_i32, %c0_i32_0 : i32, i32
  }
  func.func @transform_3(%arg0: i32) -> (i32, i32) {
    %c0_i32 = arith.constant 0 : i32
    %c0_i32_0 = arith.constant 0 : i32
    %c0_i32_1 = arith.constant 0 : i32
    return %c0_i32, %c0_i32_0 : i32, i32
  }
  func.func @transform_4(%arg0: i32) -> (i32, i32) {
    %c0_i32 = arith.constant 0 : i32
    %c0_i32_0 = arith.constant 0 : i32
    %c0_i32_1 = arith.constant 0 : i32
    return %c0_i32, %c0_i32_0 : i32, i32
  }
  func.func @transform_5(%arg0: i32) -> (i32, i32) {
    %c0_i32 = arith.constant 0 : i32
    %c0_i32_0 = arith.constant 0 : i32
    %c0_i32_1 = arith.constant 0 : i32
    return %c0_i32, %c0_i32_0 : i32, i32
  }
  func.func @transform_6(%arg0: i32) -> (i32, i32) {
    %c0_i32 = arith.constant 0 : i32
    %c0_i32_0 = arith.constant 0 : i32
    %c0_i32_1 = arith.constant 0 : i32
    return %c0_i32, %c0_i32_0 : i32, i32
  }
  func.func @transform_7(%arg0: i32) -> (i32, i32) {
    %c0_i32 = arith.constant 0 : i32
    %c0_i32_0 = arith.constant 0 : i32
    %c0_i32_1 = arith.constant 0 : i32
    return %c0_i32, %c0_i32_0 : i32, i32
  }
  func.func @transform_8(%arg0: i32) -> (i32, i32) {
    %c0_i32 = arith.constant 0 : i32
    %c0_i32_0 = arith.constant 0 : i32
    %c0_i32_1 = arith.constant 0 : i32
    return %c0_i32, %c0_i32_0 : i32, i32
  }
  func.func @transform_9(%arg0: i32) -> (i32, i32) {
    %c0_i32 = arith.constant 0 : i32
    %c0_i32_0 = arith.constant 0 : i32
    %c0_i32_1 = arith.constant 0 : i32
    return %c0_i32, %c0_i32_0 : i32, i32
  }
  func.func @transform_10(%arg0: i32) -> (i32, i32) {
    %c0_i32 = arith.constant 0 : i32
    %c0_i32_0 = arith.constant 0 : i32
    %c0_i32_1 = arith.constant 0 : i32
    return %c0_i32, %c0_i32_0 : i32, i32
  }
  func.func @transform_11(%arg0: i32) -> (i32, i32) {
    %c0_i32 = arith.constant 0 : i32
    %c0_i32_0 = arith.constant 0 : i32
    %c0_i32_1 = arith.constant 0 : i32
    return %c0_i32, %c0_i32_0 : i32, i32
  }
  func.func @transform_12(%arg0: i32) -> (i32, i32, i32) {
    %c0_i32 = arith.constant 0 : i32
    %c0_i32_0 = arith.constant 0 : i32
    %c0_i32_1 = arith.constant 0 : i32
    return %arg0, %c0_i32, %c0_i32_0 : i32, i32, i32
  }
}

</mosaic_0001>

<llo_original>
// kernel: tpu_custom_call.1
$region0: #{tpu_custom_call.1}
  #allocation0 [shape = 'u32[]', space=smem, size = 0x4, offset = 0x4, fixed_abs, tag = 'smem constant byte address 0x4 - core index']
  #allocation1 [shape = 'u32[144,128]{1,0:T(1,128)}', space=vmem, size = 0x12000, scoped, tag = 'internal scratch']
  %s0 = inlined_call_operand.vmem [shape: f32[2,8,32], index: 0, kind: input, shape index: {}]
  %s1 = inlined_call_operand.hbm [shape: s8[2,8,8], index: 1, kind: input, shape index: {}]
  %s2 = inlined_call_operand.vmem [shape: f32[1,32], index: 2, kind: input, shape index: {}]
  %s3 = inlined_call_operand.vmem [shape: f32[1,32], index: 3, kind: input, shape index: {}]
  %s4 = inlined_call_operand.vmem [shape: bf16[32,96], index: 4, kind: input, shape index: {}]
  %s5 = inlined_call_operand.vmem [shape: bf16[32,32], index: 5, kind: input, shape index: {}]
  %s6 = inlined_call_operand.hbm [shape: f32[1,32], index: 6, kind: input, shape index: {}]
  %s7 = inlined_call_operand.hbm [shape: f32[1,32], index: 7, kind: input, shape index: {}]
  %s8 = inlined_call_operand.hbm [shape: bf16[32,64], index: 8, kind: input, shape index: {}]
  %s9 = inlined_call_operand.hbm [shape: f32[1,64], index: 9, kind: input, shape index: {}]
  %s10 = inlined_call_operand.vmem [shape: bf16[64,32], index: 10, kind: input, shape index: {}]
  %s11 = inlined_call_operand.vmem [shape: f32[1,32], index: 11, kind: input, shape index: {}]
  %s12 = inlined_call_operand.hbm [shape: f32[2,8,32], index: 12, kind: output, shape index: {}]
  %s13 = sld [smem:[#allocation0]]
  $region101: #{tpu_custom_call.1} parent=0
    _
  %s15 = ssub.s32 1, %s13
  %s16 = scalar_select 0, %s15, %s13
  $region1: #{tpu_custom_call.1} parent=0
    #allocation2 [shape = 'u8[2048]{0}', space=vmem, size = 0x800, scoped, tag = 'input window, operand 1']
    #allocation3 [shape = 's32[2]{0}', space=sflag, size = 0x8, scoped, tag = 'scoped memory for tpu_custom_call.1']
    #allocation4 [shape = 's32[2]{0}', space=sflag, size = 0x8, scoped, tag = 'scoped memory for tpu_custom_call.1']
    #allocation5 [shape = 'u8[512]{0}', space=vmem, size = 0x400, scoped, tag = 'input window, operand 6, single buffered']
    #allocation6 [shape = 's32[1]{0}', space=sflag, size = 0x4, scoped, tag = 'scoped memory for tpu_custom_call.1']
    #allocation7 [shape = 'u8[512]{0}', space=vmem, size = 0x400, scoped, tag = 'input window, operand 7, single buffered']
    #allocation8 [shape = 'u8[8192]{0}', space=vmem, size = 0x2000, scoped, tag = 'input window, operand 8, single buffered']
    #allocation9 [shape = 's32[1]{0}', space=sflag, size = 0x4, scoped, tag = 'scoped memory for tpu_custom_call.1']
    #allocation10 [shape = 'u8[512]{0}', space=vmem, size = 0x400, scoped, tag = 'input window, operand 9, single buffered']
    #allocation11 [shape = 'u8[8192]{0}', space=vmem, size = 0x2000, scoped, tag = 'output window, operand 0']
    %17 = vsyncpa [#allocation3], 0
    %s18 = scalar_lea.sflag [#allocation3], 1
    %19 = vsyncpa %s18, 0
    %20 = vsyncpa [#allocation6], 0
    %21 = vsyncpa [#allocation9], 0
    %22 = vsyncpa [#allocation4], 0
    %s23 = scalar_lea.sflag [#allocation4], 1
    %24 = vsyncpa %s23, 0
    loop: start=0, step=1, limit=4
    $region2: #{tpu_custom_call.1} parent=1 // loop_pre_header
      _
    $region3: #{tpu_custom_call.1} parent=1 // loop_header
      %s26 = sphi 0, %s30
      %p27 = scmp.ge.s32.totalorder %s26, 4
      %s36 = sphi 0, %s38
      %s39 = sphi 0, %s36
      %s40 = sphi 0, %s39
      %s56 = sphi 0, %s40
      %s62 = sphi 0, %s64
      %s65 = sphi 0, %s62
      %s66 = sphi 0, %s65
      %s82 = sphi 0, %s66
      %s86 = sphi 0, %s86
      %s88 = sphi 0, %s86
      %s89 = sphi 0, %s88
      %s103 = sphi 0, %s89
      %s107 = sphi 0, %s107
      %s109 = sphi 0, %s107
      %s110 = sphi 0, %s109
      %s124 = sphi 0, %s110
      %s128 = sphi 0, %s128
      %s130 = sphi 0, %s128
      %s131 = sphi 0, %s130
      %s145 = sphi 0, %s131
      %s149 = sphi 0, %s149
      %s151 = sphi 0, %s149
      %s152 = sphi 0, %s151
      %s166 = sphi 0, %s152
      %s170 = sphi 0, %s170
      %s172 = sphi 0, %s170
      %s173 = sphi 0, %s172
      %s187 = sphi 0, %s173
      %s191 = sphi 0, %s191
      %s193 = sphi 0, %s191
      %s194 = sphi 0, %s193
      %s208 = sphi 0, %s194
      %s212 = sphi 0, %s212
      %s214 = sphi 0, %s212
      %s215 = sphi 0, %s214
      %s229 = sphi 0, %s215
      %s233 = sphi 0, %s233
      %s235 = sphi 0, %s233
      %s236 = sphi 0, %s235
      %s250 = sphi 0, %s236
      %s254 = sphi 0, %s254
      %s256 = sphi 0, %s254
      %s257 = sphi 0, %s256
      %s271 = sphi 0, %s257
      %s275 = sphi 0, %s275
      %s277 = sphi 0, %s275
      %s278 = sphi 0, %s277
      %s292 = sphi 0, %s278
      %s298 = sphi 0, %s300
      %s301 = sphi 0, %s298
      %s302 = sphi 0, %s301
      %s318 = sphi 0, %s302
    $region4: #{tpu_custom_call.1} parent=1 // loop_header_branch
      %29 = sbr.rel (%p27) target = $region8
    $region5: #{tpu_custom_call.1} parent=1 // loop_body
      %s31 = ssub.s32 %s26, 1
      %s32 = ssub.s32 %s26, 2
      %s33 = sadd.s32 %s26, 1
      %s34 = ssub.s32 %s26, %s33
      %p35 = scmp.eq.s32.totalorder %s34, 0
      %s37 = sadd.s32 %s36, 1
      %s38 = scalar_select %p35, %s36, %s37
      %p41 = pneg %p35
      %p42 = scmp.eq.s32.totalorder %s26, 1
      %p43 = por %p41, %p42
      %p44 = scmp.ne.s32.totalorder %s36, %s39
      %p45 = scmp.eq.s32.totalorder %s26, 0
      %p46 = por %p44, %p45
      %p47 = scmp.ne.s32.totalorder %s36, %s39
      %p48 = scmp.eq.s32.totalorder %s31, 1
      %p49 = por %p47, %p48
      %p50 = scmp.ne.s32.totalorder %s39, %s40
      %p51 = scmp.eq.s32.totalorder %s31, 0
      %p52 = por %p50, %p51
      %p53 = scmp.ne.s32.totalorder %s39, %s40
      %p54 = scmp.eq.s32.totalorder %s32, 1
      %p55 = por %p53, %p54
      %p57 = scmp.ne.s32.totalorder %s40, %s56
      %p58 = scmp.eq.s32.totalorder %s32, 0
      %p59 = por %p57, %p58
      %s60 = ssub.s32 %s26, %s33
      %p61 = scmp.eq.s32.totalorder %s60, 0
      %s63 = sadd.s32 %s62, 1
      %s64 = scalar_select %p61, %s62, %s63
      %p67 = pneg %p61
      %p68 = scmp.eq.s32.totalorder %s26, 1
      %p69 = por %p67, %p68
      %p70 = scmp.ne.s32.totalorder %s62, %s65
      %p71 = scmp.eq.s32.totalorder %s26, 0
      %p72 = por %p70, %p71
      %p73 = scmp.ne.s32.totalorder %s62, %s65
      %p74 = scmp.eq.s32.totalorder %s31, 1
      %p75 = por %p73, %p74
      %p76 = scmp.ne.s32.totalorder %s65, %s66
      %p77 = scmp.eq.s32.totalorder %s31, 0
      %p78 = por %p76, %p77
      %p79 = scmp.ne.s32.totalorder %s65, %s66
      %p80 = scmp.eq.s32.totalorder %s32, 1
      %p81 = por %p79, %p80
      %p83 = scmp.ne.s32.totalorder %s66, %s82
      %p84 = scmp.eq.s32.totalorder %s32, 0
      %p85 = por %p83, %p84
      %s87 = sadd.s32 %s86, 1
      %p90 = scmp.eq.s32.totalorder %s26, 1
      %p91 = scmp.ne.s32.totalorder %s86, %s88
      %p92 = scmp.eq.s32.totalorder %s26, 0
      %p93 = por %p91, %p92
      %p94 = scmp.ne.s32.totalorder %s86, %s88
      %p95 = scmp.eq.s32.totalorder %s31, 1
      %p96 = por %p94, %p95
      %p97 = scmp.ne.s32.totalorder %s88, %s89
      %p98 = scmp.eq.s32.totalorder %s31, 0
      %p99 = por %p97, %p98
      %p100 = scmp.ne.s32.totalorder %s88, %s89
      %p101 = scmp.eq.s32.totalorder %s32, 1
      %p102 = por %p100, %p101
      %p104 = scmp.ne.s32.totalorder %s89, %s103
      %p105 = scmp.eq.s32.totalorder %s32, 0
      %p106 = por %p104, %p105
      %s108 = sadd.s32 %s107, 1
      %p111 = scmp.eq.s32.totalorder %s26, 1
      %p112 = scmp.ne.s32.totalorder %s107, %s109
      %p113 = scmp.eq.s32.totalorder %s26, 0
      %p114 = por %p112, %p113
      %p115 = scmp.ne.s32.totalorder %s107, %s109
      %p116 = scmp.eq.s32.totalorder %s31, 1
      %p117 = por %p115, %p116
      %p118 = scmp.ne.s32.totalorder %s109, %s110
      %p119 = scmp.eq.s32.totalorder %s31, 0
      %p120 = por %p118, %p119
      %p121 = scmp.ne.s32.totalorder %s109, %s110
      %p122 = scmp.eq.s32.totalorder %s32, 1
      %p123 = por %p121, %p122
      %p125 = scmp.ne.s32.totalorder %s110, %s124
      %p126 = scmp.eq.s32.totalorder %s32, 0
      %p127 = por %p125, %p126
      %s129 = sadd.s32 %s128, 1
      %p132 = scmp.eq.s32.totalorder %s26, 1
      %p133 = scmp.ne.s32.totalorder %s128, %s130
      %p134 = scmp.eq.s32.totalorder %s26, 0
      %p135 = por %p133, %p134
      %p136 = scmp.ne.s32.totalorder %s128, %s130
      %p137 = scmp.eq.s32.totalorder %s31, 1
      %p138 = por %p136, %p137
      %p139 = scmp.ne.s32.totalorder %s130, %s131
      %p140 = scmp.eq.s32.totalorder %s31, 0
      %p141 = por %p139, %p140
      %p142 = scmp.ne.s32.totalorder %s130, %s131
      %p143 = scmp.eq.s32.totalorder %s32, 1
      %p144 = por %p142, %p143
      %p146 = scmp.ne.s32.totalorder %s131, %s145
      %p147 = scmp.eq.s32.totalorder %s32, 0
      %p148 = por %p146, %p147
      %s150 = sadd.s32 %s149, 1
      %p153 = scmp.eq.s32.totalorder %s26, 1
      %p154 = scmp.ne.s32.totalorder %s149, %s151
      %p155 = scmp.eq.s32.totalorder %s26, 0
      %p156 = por %p154, %p155
      %p157 = scmp.ne.s32.totalorder %s149, %s151
      %p158 = scmp.eq.s32.totalorder %s31, 1
      %p159 = por %p157, %p158
      %p160 = scmp.ne.s32.totalorder %s151, %s152
      %p161 = scmp.eq.s32.totalorder %s31, 0
      %p162 = por %p160, %p161
      %p163 = scmp.ne.s32.totalorder %s151, %s152
      %p164 = scmp.eq.s32.totalorder %s32, 1
      %p165 = por %p163, %p164
      %p167 = scmp.ne.s32.totalorder %s152, %s166
      %p168 = scmp.eq.s32.totalorder %s32, 0
      %p169 = por %p167, %p168
      %s171 = sadd.s32 %s170, 1
      %p174 = scmp.eq.s32.totalorder %s26, 1
      %p175 = scmp.ne.s32.totalorder %s170, %s172
      %p176 = scmp.eq.s32.totalorder %s26, 0
      %p177 = por %p175, %p176
      %p178 = scmp.ne.s32.totalorder %s170, %s172
      %p179 = scmp.eq.s32.totalorder %s31, 1
      %p180 = por %p178, %p179
      %p181 = scmp.ne.s32.totalorder %s172, %s173
      %p182 = scmp.eq.s32.totalorder %s31, 0
      %p183 = por %p181, %p182
      %p184 = scmp.ne.s32.totalorder %s172, %s173
      %p185 = scmp.eq.s32.totalorder %s32, 1
      %p186 = por %p184, %p185
      %p188 = scmp.ne.s32.totalorder %s173, %s187
      %p189 = scmp.eq.s32.totalorder %s32, 0
      %p190 = por %p188, %p189
      %s192 = sadd.s32 %s191, 1
      %p195 = scmp.eq.s32.totalorder %s26, 1
      %p196 = scmp.ne.s32.totalorder %s191, %s193
      %p197 = scmp.eq.s32.totalorder %s26, 0
      %p198 = por %p196, %p197
      %p199 = scmp.ne.s32.totalorder %s191, %s193
      %p200 = scmp.eq.s32.totalorder %s31, 1
      %p201 = por %p199, %p200
      %p202 = scmp.ne.s32.totalorder %s193, %s194
      %p203 = scmp.eq.s32.totalorder %s31, 0
      %p204 = por %p202, %p203
      %p205 = scmp.ne.s32.totalorder %s193, %s194
      %p206 = scmp.eq.s32.totalorder %s32, 1
      %p207 = por %p205, %p206
      %p209 = scmp.ne.s32.totalorder %s194, %s208
      %p210 = scmp.eq.s32.totalorder %s32, 0
      %p211 = por %p209, %p210
      %s213 = sadd.s32 %s212, 1
      %p216 = scmp.eq.s32.totalorder %s26, 1
      %p217 = scmp.ne.s32.totalorder %s212, %s214
      %p218 = scmp.eq.s32.totalorder %s26, 0
      %p219 = por %p217, %p218
      %p220 = scmp.ne.s32.totalorder %s212, %s214
      %p221 = scmp.eq.s32.totalorder %s31, 1
      %p222 = por %p220, %p221
      %p223 = scmp.ne.s32.totalorder %s214, %s215
      %p224 = scmp.eq.s32.totalorder %s31, 0
      %p225 = por %p223, %p224
      %p226 = scmp.ne.s32.totalorder %s214, %s215
      %p227 = scmp.eq.s32.totalorder %s32, 1
      %p228 = por %p226, %p227
      %p230 = scmp.ne.s32.totalorder %s215, %s229
      %p231 = scmp.eq.s32.totalorder %s32, 0
      %p232 = por %p230, %p231
      %s234 = sadd.s32 %s233, 1
      %p237 = scmp.eq.s32.totalorder %s26, 1
      %p238 = scmp.ne.s32.totalorder %s233, %s235
      %p239 = scmp.eq.s32.totalorder %s26, 0
      %p240 = por %p238, %p239
      %p241 = scmp.ne.s32.totalorder %s233, %s235
      %p242 = scmp.eq.s32.totalorder %s31, 1
      %p243 = por %p241, %p242
      %p244 = scmp.ne.s32.totalorder %s235, %s236
      %p245 = scmp.eq.s32.totalorder %s31, 0
      %p246 = por %p244, %p245
      %p247 = scmp.ne.s32.totalorder %s235, %s236
      %p248 = scmp.eq.s32.totalorder %s32, 1
      %p249 = por %p247, %p248
      %p251 = scmp.ne.s32.totalorder %s236, %s250
      %p252 = scmp.eq.s32.totalorder %s32, 0
      %p253 = por %p251, %p252
      %s255 = sadd.s32 %s254, 1
      %p258 = scmp.eq.s32.totalorder %s26, 1
      %p259 = scmp.ne.s32.totalorder %s254, %s256
      %p260 = scmp.eq.s32.totalorder %s26, 0
      %p261 = por %p259, %p260
      %p262 = scmp.ne.s32.totalorder %s254, %s256
      %p263 = scmp.eq.s32.totalorder %s31, 1
      %p264 = por %p262, %p263
      %p265 = scmp.ne.s32.totalorder %s256, %s257
      %p266 = scmp.eq.s32.totalorder %s31, 0
      %p267 = por %p265, %p266
      %p268 = scmp.ne.s32.totalorder %s256, %s257
      %p269 = scmp.eq.s32.totalorder %s32, 1
      %p270 = por %p268, %p269
      %p272 = scmp.ne.s32.totalorder %s257, %s271
      %p273 = scmp.eq.s32.totalorder %s32, 0
      %p274 = por %p272, %p273
      %s276 = sadd.s32 %s275, 1
      %p279 = scmp.eq.s32.totalorder %s26, 1
      %p280 = scmp.ne.s32.totalorder %s275, %s277
      %p281 = scmp.eq.s32.totalorder %s26, 0
      %p282 = por %p280, %p281
      %p283 = scmp.ne.s32.totalorder %s275, %s277
      %p284 = scmp.eq.s32.totalorder %s31, 1
      %p285 = por %p283, %p284
      %p286 = scmp.ne.s32.totalorder %s277, %s278
      %p287 = scmp.eq.s32.totalorder %s31, 0
      %p288 = por %p286, %p287
      %p289 = scmp.ne.s32.totalorder %s277, %s278
      %p290 = scmp.eq.s32.totalorder %s32, 1
      %p291 = por %p289, %p290
      %p293 = scmp.ne.s32.totalorder %s278, %s292
      %p294 = scmp.eq.s32.totalorder %s32, 0
      %p295 = por %p293, %p294
      %s296 = ssub.s32 %s26, %s33
      %p297 = scmp.eq.s32.totalorder %s296, 0
      %s299 = sadd.s32 %s298, 1
      %s300 = scalar_select %p297, %s298, %s299
      %p303 = pneg %p297
      %p304 = scmp.eq.s32.totalorder %s26, 1
      %p305 = por %p303, %p304
      %p306 = scmp.ne.s32.totalorder %s298, %s301
      %p307 = scmp.eq.s32.totalorder %s26, 0
      %p308 = por %p306, %p307
      %p309 = scmp.ne.s32.totalorder %s298, %s301
      %p310 = scmp.eq.s32.totalorder %s31, 1
      %p311 = por %p309, %p310
      %p312 = scmp.ne.s32.totalorder %s301, %s302
      %p313 = scmp.eq.s32.totalorder %s31, 0
      %p314 = por %p312, %p313
      %p315 = scmp.ne.s32.totalorder %s301, %s302
      %p316 = scmp.eq.s32.totalorder %s32, 1
      %p317 = por %p315, %p316
      %p319 = scmp.ne.s32.totalorder %s302, %s318
      %p320 = scmp.eq.s32.totalorder %s32, 0
      %p321 = por %p319, %p320
      %p322 = scmp.le.s32.totalorder 1, %s26
      %p323 = scmp.lt.s32.totalorder %s26, 3
      %p324 = pnand %p322, %p323
      %p325 = pneg %p324
      // Predicated region
      $region9: #{tpu_custom_call.1} parent=5 // pred_check
        _
      $region10: #{tpu_custom_call.1} parent=5 // pred_check_branch
        %327 = sbr.rel (%p324) target = $region12
      $region11: #{tpu_custom_call.1} parent=5 // pred_region
        %s328 = ssub.s32 %s26, 1
        // Predicated region
        $region13: #{tpu_custom_call.1} parent=11 // pred_check
          %p329 = pneg %p99
        $region14: #{tpu_custom_call.1} parent=11 // pred_check_branch
          %331 = sbr.rel (%p329) target = $region16
        $region15: #{tpu_custom_call.1} parent=11 // pred_region
          _
        $region16: #{tpu_custom_call.1} parent=11 // pred_fallthru
          _
        // Predicated region
        $region17: #{tpu_custom_call.1} parent=11 // pred_check
          %p332 = pneg %p120
        $region18: #{tpu_custom_call.1} parent=11 // pred_check_branch
          %334 = sbr.rel (%p332) target = $region20
        $region19: #{tpu_custom_call.1} parent=11 // pred_region
          _
        $region20: #{tpu_custom_call.1} parent=11 // pred_fallthru
          _
        // Predicated region
        $region21: #{tpu_custom_call.1} parent=11 // pred_check
          %p335 = pneg %p141
        $region22: #{tpu_custom_call.1} parent=11 // pred_check_branch
          %337 = sbr.rel (%p335) target = $region24
        $region23: #{tpu_custom_call.1} parent=11 // pred_region
          _
        $region24: #{tpu_custom_call.1} parent=11 // pred_fallthru
          _
        // Predicated region
        $region25: #{tpu_custom_call.1} parent=11 // pred_check
          %p338 = pneg %p162
        $region26: #{tpu_custom_call.1} parent=11 // pred_check_branch
          %340 = sbr.rel (%p338) target = $region28
        $region27: #{tpu_custom_call.1} parent=11 // pred_region
          _
        $region28: #{tpu_custom_call.1} parent=11 // pred_fallthru
          _
        // Predicated region
        $region29: #{tpu_custom_call.1} parent=11 // pred_check
          %p341 = pneg %p183
        $region30: #{tpu_custom_call.1} parent=11 // pred_check_branch
          %343 = sbr.rel (%p341) target = $region32
        $region31: #{tpu_custom_call.1} parent=11 // pred_region
          %s345 = ssub.s32 16, 16
          %346 = vsyncadd [#allocation6], %s345
          %s348 = sshll.u32 [#allocation5], 4
          %s349 = int_to_ptr.vmem [resolvable:$true] %s348
          %351 = dma.hbm_to_vmem [thread:$0]  %s6, 16, %s349, [#allocation6]
        $region32: #{tpu_custom_call.1} parent=11 // pred_fallthru
          _
        // Predicated region
        $region33: #{tpu_custom_call.1} parent=11 // pred_check
          %p352 = pneg %p204
        $region34: #{tpu_custom_call.1} parent=11 // pred_check_branch
          %354 = sbr.rel (%p352) target = $region36
        $region35: #{tpu_custom_call.1} parent=11 // pred_region
          %s356 = ssub.s32 16, 16
          %357 = vsyncadd [#allocation6], %s356
          %s359 = sshll.u32 [#allocation7], 4
          %s360 = int_to_ptr.vmem [resolvable:$true] %s359
          %362 = dma.hbm_to_vmem [thread:$0]  %s7, 16, %s360, [#allocation6]
        $region36: #{tpu_custom_call.1} parent=11 // pred_fallthru
          _
        // Predicated region
        $region37: #{tpu_custom_call.1} parent=11 // pred_check
          %p363 = pneg %p225
        $region38: #{tpu_custom_call.1} parent=11 // pred_check_branch
          %365 = sbr.rel (%p363) target = $region40
        $region39: #{tpu_custom_call.1} parent=11 // pred_region
          %s367 = ssub.s32 256, 256
          %368 = vsyncadd [#allocation9], %s367
          %s369 = sshll.u32 [#allocation8], 4
          %s370 = int_to_ptr.vmem [resolvable:$true] %s369
          %375 = dma.hbm_to_vmem [thread:$0]  %s8, 256, %s370, [#allocation9], 64, 64, 4
        $region40: #{tpu_custom_call.1} parent=11 // pred_fallthru
          _
        // Predicated region
        $region41: #{tpu_custom_call.1} parent=11 // pred_check
          %p376 = pneg %p246
        $region42: #{tpu_custom_call.1} parent=11 // pred_check_branch
          %378 = sbr.rel (%p376) target = $region44
        $region43: #{tpu_custom_call.1} parent=11 // pred_region
          %s380 = ssub.s32 16, 16
          %381 = vsyncadd [#allocation9], %s380
          %s383 = sshll.u32 [#allocation10], 4
          %s384 = int_to_ptr.vmem [resolvable:$true] %s383
          %386 = dma.hbm_to_vmem [thread:$0]  %s9, 16, %s384, [#allocation9]
        $region44: #{tpu_custom_call.1} parent=11 // pred_fallthru
          _
        // Predicated region
        $region45: #{tpu_custom_call.1} parent=11 // pred_check
          %p387 = pneg %p267
        $region46: #{tpu_custom_call.1} parent=11 // pred_check_branch
          %389 = sbr.rel (%p387) target = $region48
        $region47: #{tpu_custom_call.1} parent=11 // pred_region
          _
        $region48: #{tpu_custom_call.1} parent=11 // pred_fallthru
          _
        // Predicated region
        $region49: #{tpu_custom_call.1} parent=11 // pred_check
          %p390 = pneg %p288
        $region50: #{tpu_custom_call.1} parent=11 // pred_check_branch
          %392 = sbr.rel (%p390) target = $region52
        $region51: #{tpu_custom_call.1} parent=11 // pred_region
          _
        $region52: #{tpu_custom_call.1} parent=11 // pred_fallthru
          _
      $region12: #{tpu_custom_call.1} parent=5 // pred_fallthru
        _
      %p393 = scmp.lt.s32.totalorder %s26, 2
      // Predicated region
      $region53: #{tpu_custom_call.1} parent=5 // pred_check
        %p394 = pneg %p393
      $region54: #{tpu_custom_call.1} parent=5 // pred_check_branch
        %396 = sbr.rel (%p394) target = $region56
      $region55: #{tpu_custom_call.1} parent=5 // pred_region
        // Predicated region
        $region57: #{tpu_custom_call.1} parent=55 // pred_check
          %p397 = pneg %p46
        $region58: #{tpu_custom_call.1} parent=55 // pred_check_branch
          %399 = sbr.rel (%p397) target = $region60
        $region59: #{tpu_custom_call.1} parent=55 // pred_region
          %p400 = scmp.lt.s32.totalorder %s26, 1
          %s401 = scalar_select %p400, %s26, 1
          %s402 = smul.addr %s401, 8
          %s403 = scalar_lea.vmem %s0, %s402
        $region60: #{tpu_custom_call.1} parent=55 // pred_fallthru
          _
        // Predicated region
        $region61: #{tpu_custom_call.1} parent=55 // pred_check
          %p404 = pneg %p72
        $region62: #{tpu_custom_call.1} parent=55 // pred_check_branch
          %406 = sbr.rel (%p404) target = $region64
        $region63: #{tpu_custom_call.1} parent=55 // pred_region
          %s407 = sand.u32 %s62, 1
          %s408 = scalar_lea.sflag [#allocation3], %s407
          %s409 = sand.u32 %s62, 1
          %s410 = smul.addr %s409, 2
          %s411 = scalar_lea.vmem [#allocation2], %s410
          %s413 = ssub.s32 32, 32
          %414 = vsyncadd %s408, %s413
          %s415 = smul.addr %s26, 32
          %s416 = scalar_lea.hbm %s1, %s415
          %s418 = sshll.u32 %s411, 4
          %s419 = int_to_ptr.vmem [resolvable:$true] %s418
          %421 = dma.hbm_to_vmem [thread:$0]  %s416, 32, %s419, %s408
        $region64: #{tpu_custom_call.1} parent=55 // pred_fallthru
          _
      $region56: #{tpu_custom_call.1} parent=5 // pred_fallthru
        _
      %p422 = scmp.le.s32.totalorder 1, %s26
      %p423 = scmp.lt.s32.totalorder %s26, 3
      %p424 = pnand %p422, %p423
      %p425 = pneg %p424
      // Predicated region
      $region65: #{tpu_custom_call.1} parent=5 // pred_check
        _
      $region66: #{tpu_custom_call.1} parent=5 // pred_check_branch
        %427 = sbr.rel (%p424) target = $region68
      $region67: #{tpu_custom_call.1} parent=5 // pred_region
        %s428 = ssub.s32 %s26, 1
        %s429 = sand.u32 %s65, 1
        %s430 = scalar_lea.sflag [#allocation3], %s429
        %s431 = sand.u32 %s65, 1
        %s432 = smul.addr %s431, 2
        %s433 = scalar_lea.vmem [#allocation2], %s432
        // Predicated region
        $region69: #{tpu_custom_call.1} parent=67 // pred_check
          %p434 = pneg %p78
        $region70: #{tpu_custom_call.1} parent=67 // pred_check_branch
          %436 = sbr.rel (%p434) target = $region72
        $region71: #{tpu_custom_call.1} parent=67 // pred_region
          %437 = dma.done %s430, 32
        $region72: #{tpu_custom_call.1} parent=67 // pred_fallthru
          _
        // Predicated region
        $region73: #{tpu_custom_call.1} parent=67 // pred_check
          %p438 = pneg %p183
        $region74: #{tpu_custom_call.1} parent=67 // pred_check_branch
          %440 = sbr.rel (%p438) target = $region76
        $region75: #{tpu_custom_call.1} parent=67 // pred_region
          %441 = dma.done [#allocation6], 16
        $region76: #{tpu_custom_call.1} parent=67 // pred_fallthru
          _
        // Predicated region
        $region77: #{tpu_custom_call.1} parent=67 // pred_check
          %p442 = pneg %p204
        $region78: #{tpu_custom_call.1} parent=67 // pred_check_branch
          %444 = sbr.rel (%p442) target = $region80
        $region79: #{tpu_custom_call.1} parent=67 // pred_region
          %445 = dma.done [#allocation6], 16
        $region80: #{tpu_custom_call.1} parent=67 // pred_fallthru
          _
        // Predicated region
        $region81: #{tpu_custom_call.1} parent=67 // pred_check
          %p446 = pneg %p225
        $region82: #{tpu_custom_call.1} parent=67 // pred_check_branch
          %448 = sbr.rel (%p446) target = $region84
        $region83: #{tpu_custom_call.1} parent=67 // pred_region
          %449 = dma.done [#allocation9], 256
        $region84: #{tpu_custom_call.1} parent=67 // pred_fallthru
          _
        // Predicated region
        $region85: #{tpu_custom_call.1} parent=67 // pred_check
          %p450 = pneg %p246
        $region86: #{tpu_custom_call.1} parent=67 // pred_check_branch
          %452 = sbr.rel (%p450) target = $region88
        $region87: #{tpu_custom_call.1} parent=67 // pred_region
          %453 = dma.done [#allocation9], 16
        $region88: #{tpu_custom_call.1} parent=67 // pred_fallthru
          _
        %p454 = scmp.lt.s32.totalorder %s31, 1
        %s455 = scalar_select %p454, %s31, 1
        %s456 = smul.addr %s455, 8
        %s457 = scalar_lea.vmem %s0, %s456
        %p458 = pneg %p52
        %p459 = pneg %p49
        %s460 = sand.u32 %s65, 1
        %s461 = scalar_lea.sflag [#allocation3], %s460
        %s462 = sand.u32 %s65, 1
        %s463 = smul.addr %s462, 2
        %s464 = scalar_lea.vmem [#allocation2], %s463
        %p465 = pneg %p78
        %p466 = pneg %p75
        %p467 = pneg %p99
        %p468 = pneg %p96
        %p469 = pneg %p120
        %p470 = pneg %p117
        %p471 = pneg %p141
        %p472 = pneg %p138
        %p473 = pneg %p162
        %p474 = pneg %p159
        %p475 = pneg %p183
        %p476 = pneg %p180
        %p477 = pneg %p204
        %p478 = pneg %p201
        %p479 = pneg %p225
        %p480 = pneg %p222
        %p481 = pneg %p246
        %p482 = pneg %p243
        %p483 = pneg %p267
        %p484 = pneg %p264
        %p485 = pneg %p288
        %p486 = pneg %p285
        %p487 = pneg %p314
        %p488 = pneg %p311
        %s489 = sand.u32 %s301, 1
        %s490 = scalar_lea.sflag [#allocation4], %s489
        %s491 = sand.u32 %s301, 1
        %s492 = smul.addr %s491, 8
        %s493 = scalar_lea.vmem [#allocation11], %s492
        %p494 = scmp.lt.s32.totalorder %s31, 1
        %s495 = scalar_select %p494, %s31, 1
        %s496 = smul.addr %s495, 8
        %s497 = scalar_lea.vmem %s0, %s496
        %v499 = vld [vmem:[%s497] sm:$0xff]
        %v500 = vld [vmem:[%s2] sm:$0x1]
        %v501 = vld [vmem:[%s3] sm:$0x1]
        %vm502 = vcmask 261120
        %v503 = vsel %vm502, %v499, 0.0
        %504 = vadd.xlane.f32.xlu0 %v503
        %v505 = vpop.xlane.xlu0 %504
        %v506 = vrcp.pop 32.0
        %v507 = vmul.f32 %v505, %v506
        %v508 = vsub.f32 %v499, %v507
        %v509 = vmul.f32 %v508, %v508
        %v510 = vsel %vm502, %v509, 0.0
        %511 = vadd.xlane.f32.xlu0 %v510
        %v512 = vpop.xlane.xlu0 %511
        %v513 = vmul.f32 %v512, 0.032258064
        %v514 = vrsqrt.pop %v513
        %v515 = vmul.f32 %v513, %v514
        %vm516 = vcmp.eq.f32.partialorder %v513, inf
        %v517 = vsel %vm516, %v513, %v515
        %vm518 = vcmp.eq.f32.partialorder %v513, 0.0
        %v519 = vand.u32 %v513, 2147483648
        %v520 = vsel %vm518, %v519, %v517
        %v521 = vadd.f32 %v520, 1e-06
        %v522 = vrcp.pop %v521
        %v524 = vlaneseq
        %v525 = vshrl.u32 %v524, 7
        %v526 = vsub.s32 0, %v525
        %v527 = vrot.slane %v500, %v526
        %v529 = vmul.f32 %v527, %v508
        %v530 = vmul.f32 %v529, %v522
        %v532 = vlaneseq
        %v533 = vshrl.u32 %v532, 7
        %v534 = vsub.s32 0, %v533
        %v535 = vrot.slane %v501, %v534
        %v537 = vadd.f32 %v530, %v535
        %v538 = vpack.c.bf16 %v537, %v537
        %v539 = vld [vmem:[%s4] sm:$0xf]
        %v540 = vld [vmem:[%s4 + $0x4] sm:$0xf]
        %v541 = vld [vmem:[%s4 + $0x8] sm:$0xf]
        %v542 = vld [vmem:[%s4 + $0xc] sm:$0xf]
        %v547 = vunpack.c.l.b16 %v539
        %v548 = vunpack.c.l.b16 %v540
        %v549 = vunpack.c.l.b16 %v541
        %v550 = vunpack.c.l.b16 %v542
        %v551 = vpack.c.b16 %v548, %v547
        %v552 = vpack.c.b16 %v550, %v549
        %v556 = vsel %vm502, %v538, 0
        %558 = vmatprep.subr.bf16.mxu0 0
        %559 = vmatpush1.bf16.msra.mxu0 0
        %560 = vmatprep.subr.bf16.mxu0 0
        %561 = vmatpush1.bf16.msra.mxu0 0
        %562 = vmatprep.subr.bf16.mxu0 0
        %563 = vmatpush1.bf16.msra.mxu0 0
        %564 = vmatprep.subr.bf16.mxu0 0
        %565 = vmatpush1.bf16.msra.mxu0 0
        %566 = vmatprep.subr.bf16.mxu0 0
        %567 = vmatpush1.bf16.msra.mxu0 0
        %568 = vmatprep.subr.bf16.mxu0 0
        %569 = vmatpush1.bf16.msra.mxu0 0
        %570 = vmatprep.subr.bf16.mxu0 0
        %571 = vmatpush1.bf16.msra.mxu0 %v552
        %572 = vmatprep.subr.bf16.mxu0 0
        %573 = vmatpush1.bf16.msra.mxu0 %v551
        %574 = vmatprep.subr.bf16.mxu0 0
        %575 = vmatpush2.bf16.msra.mxu0 0
        %576 = vmatprep.subr.bf16.mxu0 0
        %577 = vmatpush2.bf16.msra.mxu0 0
        %578 = vmatprep.subr.bf16.mxu0 0
        %579 = vmatpush2.bf16.msra.mxu0 0
        %580 = vmatprep.subr.bf16.mxu0 0
        %581 = vmatpush2.bf16.msra.mxu0 0
        %582 = vmatprep.subr.bf16.mxu0 0
        %583 = vmatpush2.bf16.msra.mxu0 0
        %584 = vmatprep.subr.bf16.mxu0 0
        %585 = vmatpush2.bf16.msra.mxu0 0
        %586 = vmatprep.subr.bf16.mxu0 0
        %587 = vmatpush2.bf16.msra.mxu0 0
        %588 = vmatprep.subr.bf16.mxu0 0
        %589 = vmatpush2.bf16.msra.mxu0 0
        %590 = vmatprep.mubr.bf16.mxu0 0
        %591 = vmatmul.mubr.bf16.gmra.mxu0 %v556
        %v592 = vpop.f32.mrf.mxu0
        %v593 = vadd.f32 0.0, %v592
        %v594 = vpop.f32.mrf.mxu0
        %v595 = vpop.f32.mrf.mxu0
        %v596 = vpop.f32.mrf.mxu0
        %597 = vdwg.mxu0
        %v598 = vpack.c.bf16 %v593, %v593
        %v599 = vld [vmem:[%s433] sm:$0x3]
        %v600 = vunpack.c.0.s8 %v599
        %v601 = vcvt.s32.f32 %v600
        %vm602 = vcmp.gt.f32.partialorder %v601, 0.0
        %604 = vrot.lane.b32.xlu0 %v598, 96
        %v605 = vpop.permute.xlu0 %604
        %vm606 = vcmask 64512
        %v608 = vsel %vm606, %v598, 0
        %v611 = vsel %vm606, %v605, 0
        %613 = vmatprep.subr.bf16.mxu0 0
        %614 = vmatpush1.bf16.xpose.msra.mxu0 0
        %615 = vmatprep.subr.bf16.mxu0 0
        %616 = vmatpush1.bf16.xpose.msra.mxu0 0
        %617 = vmatprep.subr.bf16.mxu0 0
        %618 = vmatpush1.bf16.xpose.msra.mxu0 0
        %619 = vmatprep.subr.bf16.mxu0 0
        %620 = vmatpush1.bf16.xpose.msra.mxu0 0
        %621 = vmatprep.subr.bf16.mxu0 0
        %622 = vmatpush1.bf16.xpose.msra.mxu0 0
        %623 = vmatprep.subr.bf16.mxu0 0
        %624 = vmatpush1.bf16.xpose.msra.mxu0 0
        %625 = vmatprep.subr.bf16.mxu0 0
        %626 = vmatpush1.bf16.xpose.msra.mxu0 0
        %627 = vmatprep.subr.bf16.mxu0 0
        %628 = vmatpush1.bf16.xpose.msra.mxu0 %v611
        %629 = vmatprep.subr.bf16.mxu0 0
        %630 = vmatpush2.bf16.xpose.msra.mxu0 0
        %631 = vmatprep.subr.bf16.mxu0 0
        %632 = vmatpush2.bf16.xpose.msra.mxu0 0
        %633 = vmatprep.subr.bf16.mxu0 0
        %634 = vmatpush2.bf16.xpose.msra.mxu0 0
        %635 = vmatprep.subr.bf16.mxu0 0
        %636 = vmatpush2.bf16.xpose.msra.mxu0 0
        %637 = vmatprep.subr.bf16.mxu0 0
        %638 = vmatpush2.bf16.xpose.msra.mxu0 0
        %639 = vmatprep.subr.bf16.mxu0 0
        %640 = vmatpush2.bf16.xpose.msra.mxu0 0
        %641 = vmatprep.subr.bf16.mxu0 0
        %642 = vmatpush2.bf16.xpose.msra.mxu0 0
        %643 = vmatprep.subr.bf16.mxu0 0
        %644 = vmatpush2.bf16.xpose.msra.mxu0 0
        %645 = vmatprep.mubr.bf16.mxu0 0
        %646 = vmatmul.mubr.bf16.gmra.mxu0 %v608
        %v647 = vpop.f32.mrf.mxu0
        %v648 = vadd.f32 0.0, %v647
        %v649 = vpop.f32.mrf.mxu0
        %v650 = vpop.f32.mrf.mxu0
        %v651 = vpop.f32.mrf.mxu0
        %652 = vdwg.mxu0
        %v653 = vsel %vm602, %v648, -1e+20
        %v654 = vsel %vm606, %v653, -inf
        %655 = vmax.xlane.f32.xlu0 %v654
        %v656 = vpop.xlane.xlu0 %655
        %v657 = vsub.f32 %v653, %v656
        %v658 = vmul.f32 %v657, 1.442695
        %v659 = vpow.pop %v658
        %v660 = vsel %vm606, %v659, 0.0
        %661 = vadd.xlane.f32.xlu0 %v660
        %v662 = vpop.xlane.xlu0 %661
        %v663 = vrcp.pop %v662
        %v664 = vmul.f32 %v659, %v663
        %v665 = vpack.c.bf16 %v664, %v664
        %666 = vrot.lane.b32.xlu0 %v598, 64
        %v667 = vpop.permute.xlu0 %666
        %v669 = vsel %vm606, %v665, 0
        %vm671 = vcmask 1043456
        %v673 = vsel %vm671, %v667, 0
        %675 = vmatprep.subr.bf16.mxu0 0
        %676 = vmatpush1.bf16.msra.mxu0 0
        %677 = vmatprep.subr.bf16.mxu0 0
        %678 = vmatpush1.bf16.msra.mxu0 0
        %679 = vmatprep.subr.bf16.mxu0 0
        %680 = vmatpush1.bf16.msra.mxu0 0
        %681 = vmatprep.subr.bf16.mxu0 0
        %682 = vmatpush1.bf16.msra.mxu0 0
        %683 = vmatprep.subr.bf16.mxu0 0
        %684 = vmatpush1.bf16.msra.mxu0 0
        %685 = vmatprep.subr.bf16.mxu0 0
        %686 = vmatpush1.bf16.msra.mxu0 0
        %687 = vmatprep.subr.bf16.mxu0 0
        %688 = vmatpush1.bf16.msra.mxu0 0
        %689 = vmatprep.subr.bf16.mxu0 0
        %690 = vmatpush1.bf16.msra.mxu0 %v673
        %691 = vmatprep.subr.bf16.mxu0 0
        %692 = vmatpush2.bf16.msra.mxu0 0
        %693 = vmatprep.subr.bf16.mxu0 0
        %694 = vmatpush2.bf16.msra.mxu0 0
        %695 = vmatprep.subr.bf16.mxu0 0
        %696 = vmatpush2.bf16.msra.mxu0 0
        %697 = vmatprep.subr.bf16.mxu0 0
        %698 = vmatpush2.bf16.msra.mxu0 0
        %699 = vmatprep.subr.bf16.mxu0 0
        %700 = vmatpush2.bf16.msra.mxu0 0
        %701 = vmatprep.subr.bf16.mxu0 0
        %702 = vmatpush2.bf16.msra.mxu0 0
        %703 = vmatprep.subr.bf16.mxu0 0
        %704 = vmatpush2.bf16.msra.mxu0 0
        %705 = vmatprep.subr.bf16.mxu0 0
        %706 = vmatpush2.bf16.msra.mxu0 0
        %707 = vmatprep.mubr.bf16.mxu0 0
        %708 = vmatmul.mubr.bf16.gmra.mxu0 %v669
        %v709 = vpop.f32.mrf.mxu0
        %v710 = vadd.f32 0.0, %v709
        %v711 = vpop.f32.mrf.mxu0
        %v712 = vpop.f32.mrf.mxu0
        %v713 = vpop.f32.mrf.mxu0
        %714 = vdwg.mxu0
        %715 = vrot.lane.b32.xlu0 %v598, 120
        %v716 = vpop.permute.xlu0 %715
        %717 = vrot.lane.b32.xlu0 %v598, 88
        %v718 = vpop.permute.xlu0 %717
        %v720 = vsel %vm606, %v716, 0
        %v723 = vsel %vm606, %v718, 0
        %725 = vmatprep.subr.bf16.mxu0 0
        %726 = vmatpush1.bf16.xpose.msra.mxu0 0
        %727 = vmatprep.subr.bf16.mxu0 0
        %728 = vmatpush1.bf16.xpose.msra.mxu0 0
        %729 = vmatprep.subr.bf16.mxu0 0
        %730 = vmatpush1.bf16.xpose.msra.mxu0 0
        %731 = vmatprep.subr.bf16.mxu0 0
        %732 = vmatpush1.bf16.xpose.msra.mxu0 0
        %733 = vmatprep.subr.bf16.mxu0 0
        %734 = vmatpush1.bf16.xpose.msra.mxu0 0
        %735 = vmatprep.subr.bf16.mxu0 0
        %736 = vmatpush1.bf16.xpose.msra.mxu0 0
        %737 = vmatprep.subr.bf16.mxu0 0
        %738 = vmatpush1.bf16.xpose.msra.mxu0 0
        %739 = vmatprep.subr.bf16.mxu0 0
        %740 = vmatpush1.bf16.xpose.msra.mxu0 %v723
        %741 = vmatprep.subr.bf16.mxu0 0
        %742 = vmatpush2.bf16.xpose.msra.mxu0 0
        %743 = vmatprep.subr.bf16.mxu0 0
        %744 = vmatpush2.bf16.xpose.msra.mxu0 0
        %745 = vmatprep.subr.bf16.mxu0 0
        %746 = vmatpush2.bf16.xpose.msra.mxu0 0
        %747 = vmatprep.subr.bf16.mxu0 0
        %748 = vmatpush2.bf16.xpose.msra.mxu0 0
        %749 = vmatprep.subr.bf16.mxu0 0
        %750 = vmatpush2.bf16.xpose.msra.mxu0 0
        %751 = vmatprep.subr.bf16.mxu0 0
        %752 = vmatpush2.bf16.xpose.msra.mxu0 0
        %753 = vmatprep.subr.bf16.mxu0 0
        %754 = vmatpush2.bf16.xpose.msra.mxu0 0
        %755 = vmatprep.subr.bf16.mxu0 0
        %756 = vmatpush2.bf16.xpose.msra.mxu0 0
        %757 = vmatprep.mubr.bf16.mxu0 0
        %758 = vmatmul.mubr.bf16.gmra.mxu0 %v720
        %v759 = vpop.f32.mrf.mxu0
        %v760 = vadd.f32 0.0, %v759
        %v761 = vpop.f32.mrf.mxu0
        %v762 = vpop.f32.mrf.mxu0
        %v763 = vpop.f32.mrf.mxu0
        %764 = vdwg.mxu0
        %v765 = vsel %vm602, %v760, -1e+20
        %v766 = vsel %vm606, %v765, -inf
        %767 = vmax.xlane.f32.xlu0 %v766
        %v768 = vpop.xlane.xlu0 %767
        %v769 = vsub.f32 %v765, %v768
        %v770 = vmul.f32 %v769, 1.442695
        %v771 = vpow.pop %v770
        %v772 = vsel %vm606, %v771, 0.0
        %773 = vadd.xlane.f32.xlu0 %v772
        %v774 = vpop.xlane.xlu0 %773
        %v775 = vrcp.pop %v774
        %v776 = vmul.f32 %v771, %v775
        %v777 = vpack.c.bf16 %v776, %v776
        %778 = vrot.lane.b32.xlu0 %v598, 56
        %v779 = vpop.permute.xlu0 %778
        %v781 = vsel %vm606, %v777, 0
        %v784 = vsel %vm671, %v779, 0
        %786 = vmatprep.subr.bf16.mxu0 0
        %787 = vmatpush1.bf16.msra.mxu0 0
        %788 = vmatprep.subr.bf16.mxu0 0
        %789 = vmatpush1.bf16.msra.mxu0 0
        %790 = vmatprep.subr.bf16.mxu0 0
        %791 = vmatpush1.bf16.msra.mxu0 0
        %792 = vmatprep.subr.bf16.mxu0 0
        %793 = vmatpush1.bf16.msra.mxu0 0
        %794 = vmatprep.subr.bf16.mxu0 0
        %795 = vmatpush1.bf16.msra.mxu0 0
        %796 = vmatprep.subr.bf16.mxu0 0
        %797 = vmatpush1.bf16.msra.mxu0 0
        %798 = vmatprep.subr.bf16.mxu0 0
        %799 = vmatpush1.bf16.msra.mxu0 0
        %800 = vmatprep.subr.bf16.mxu0 0
        %801 = vmatpush1.bf16.msra.mxu0 %v784
        %802 = vmatprep.subr.bf16.mxu0 0
        %803 = vmatpush2.bf16.msra.mxu0 0
        %804 = vmatprep.subr.bf16.mxu0 0
        %805 = vmatpush2.bf16.msra.mxu0 0
        %806 = vmatprep.subr.bf16.mxu0 0
        %807 = vmatpush2.bf16.msra.mxu0 0
        %808 = vmatprep.subr.bf16.mxu0 0
        %809 = vmatpush2.bf16.msra.mxu0 0
        %810 = vmatprep.subr.bf16.mxu0 0
        %811 = vmatpush2.bf16.msra.mxu0 0
        %812 = vmatprep.subr.bf16.mxu0 0
        %813 = vmatpush2.bf16.msra.mxu0 0
        %814 = vmatprep.subr.bf16.mxu0 0
        %815 = vmatpush2.bf16.msra.mxu0 0
        %816 = vmatprep.subr.bf16.mxu0 0
        %817 = vmatpush2.bf16.msra.mxu0 0
        %818 = vmatprep.mubr.bf16.mxu0 0
        %819 = vmatmul.mubr.bf16.gmra.mxu0 %v781
        %v820 = vpop.f32.mrf.mxu0
        %v821 = vadd.f32 0.0, %v820
        %v822 = vpop.f32.mrf.mxu0
        %v823 = vpop.f32.mrf.mxu0
        %v824 = vpop.f32.mrf.mxu0
        %825 = vdwg.mxu0
        %826 = vrot.lane.b32.xlu0 %v598, 112
        %v827 = vpop.permute.xlu0 %826
        %828 = vrot.lane.b32.xlu0 %v598, 80
        %v829 = vpop.permute.xlu0 %828
        %v831 = vsel %vm606, %v827, 0
        %v834 = vsel %vm606, %v829, 0
        %836 = vmatprep.subr.bf16.mxu0 0
        %837 = vmatpush1.bf16.xpose.msra.mxu0 0
        %838 = vmatprep.subr.bf16.mxu0 0
        %839 = vmatpush1.bf16.xpose.msra.mxu0 0
        %840 = vmatprep.subr.bf16.mxu0 0
        %841 = vmatpush1.bf16.xpose.msra.mxu0 0
        %842 = vmatprep.subr.bf16.mxu0 0
        %843 = vmatpush1.bf16.xpose.msra.mxu0 0
        %844 = vmatprep.subr.bf16.mxu0 0
        %845 = vmatpush1.bf16.xpose.msra.mxu0 0
        %846 = vmatprep.subr.bf16.mxu0 0
        %847 = vmatpush1.bf16.xpose.msra.mxu0 0
        %848 = vmatprep.subr.bf16.mxu0 0
        %849 = vmatpush1.bf16.xpose.msra.mxu0 0
        %850 = vmatprep.subr.bf16.mxu0 0
        %851 = vmatpush1.bf16.xpose.msra.mxu0 %v834
        %852 = vmatprep.subr.bf16.mxu0 0
        %853 = vmatpush2.bf16.xpose.msra.mxu0 0
        %854 = vmatprep.subr.bf16.mxu0 0
        %855 = vmatpush2.bf16.xpose.msra.mxu0 0
        %856 = vmatprep.subr.bf16.mxu0 0
        %857 = vmatpush2.bf16.xpose.msra.mxu0 0
        %858 = vmatprep.subr.bf16.mxu0 0
        %859 = vmatpush2.bf16.xpose.msra.mxu0 0
        %860 = vmatprep.subr.bf16.mxu0 0
        %861 = vmatpush2.bf16.xpose.msra.mxu0 0
        %862 = vmatprep.subr.bf16.mxu0 0
        %863 = vmatpush2.bf16.xpose.msra.mxu0 0
        %864 = vmatprep.subr.bf16.mxu0 0
        %865 = vmatpush2.bf16.xpose.msra.mxu0 0
        %866 = vmatprep.subr.bf16.mxu0 0
        %867 = vmatpush2.bf16.xpose.msra.mxu0 0
        %868 = vmatprep.mubr.bf16.mxu0 0
        %869 = vmatmul.mubr.bf16.gmra.mxu0 %v831
        %v870 = vpop.f32.mrf.mxu0
        %v871 = vadd.f32 0.0, %v870
        %v872 = vpop.f32.mrf.mxu0
        %v873 = vpop.f32.mrf.mxu0
        %v874 = vpop.f32.mrf.mxu0
        %875 = vdwg.mxu0
        %v876 = vsel %vm602, %v871, -1e+20
        %v877 = vsel %vm606, %v876, -inf
        %878 = vmax.xlane.f32.xlu0 %v877
        %v879 = vpop.xlane.xlu0 %878
        %v880 = vsub.f32 %v876, %v879
        %v881 = vmul.f32 %v880, 1.442695
        %v882 = vpow.pop %v881
        %v883 = vsel %vm606, %v882, 0.0
        %884 = vadd.xlane.f32.xlu0 %v883
        %v885 = vpop.xlane.xlu0 %884
        %v886 = vrcp.pop %v885
        %v887 = vmul.f32 %v882, %v886
        %v888 = vpack.c.bf16 %v887, %v887
        %889 = vrot.lane.b32.xlu0 %v598, 48
        %v890 = vpop.permute.xlu0 %889
        %v892 = vsel %vm606, %v888, 0
        %v895 = vsel %vm671, %v890, 0
        %897 = vmatprep.subr.bf16.mxu0 0
        %898 = vmatpush1.bf16.msra.mxu0 0
        %899 = vmatprep.subr.bf16.mxu0 0
        %900 = vmatpush1.bf16.msra.mxu0 0
        %901 = vmatprep.subr.bf16.mxu0 0
        %902 = vmatpush1.bf16.msra.mxu0 0
        %903 = vmatprep.subr.bf16.mxu0 0
        %904 = vmatpush1.bf16.msra.mxu0 0
        %905 = vmatprep.subr.bf16.mxu0 0
        %906 = vmatpush1.bf16.msra.mxu0 0
        %907 = vmatprep.subr.bf16.mxu0 0
        %908 = vmatpush1.bf16.msra.mxu0 0
        %909 = vmatprep.subr.bf16.mxu0 0
        %910 = vmatpush1.bf16.msra.mxu0 0
        %911 = vmatprep.subr.bf16.mxu0 0
        %912 = vmatpush1.bf16.msra.mxu0 %v895
        %913 = vmatprep.subr.bf16.mxu0 0
        %914 = vmatpush2.bf16.msra.mxu0 0
        %915 = vmatprep.subr.bf16.mxu0 0
        %916 = vmatpush2.bf16.msra.mxu0 0
        %917 = vmatprep.subr.bf16.mxu0 0
        %918 = vmatpush2.bf16.msra.mxu0 0
        %919 = vmatprep.subr.bf16.mxu0 0
        %920 = vmatpush2.bf16.msra.mxu0 0
        %921 = vmatprep.subr.bf16.mxu0 0
        %922 = vmatpush2.bf16.msra.mxu0 0
        %923 = vmatprep.subr.bf16.mxu0 0
        %924 = vmatpush2.bf16.msra.mxu0 0
        %925 = vmatprep.subr.bf16.mxu0 0
        %926 = vmatpush2.bf16.msra.mxu0 0
        %927 = vmatprep.subr.bf16.mxu0 0
        %928 = vmatpush2.bf16.msra.mxu0 0
        %929 = vmatprep.mubr.bf16.mxu0 0
        %930 = vmatmul.mubr.bf16.gmra.mxu0 %v892
        %v931 = vpop.f32.mrf.mxu0
        %v932 = vadd.f32 0.0, %v931
        %v933 = vpop.f32.mrf.mxu0
        %v934 = vpop.f32.mrf.mxu0
        %v935 = vpop.f32.mrf.mxu0
        %936 = vdwg.mxu0
        %937 = vrot.lane.b32.xlu0 %v598, 104
        %v938 = vpop.permute.xlu0 %937
        %939 = vrot.lane.b32.xlu0 %v598, 72
        %v940 = vpop.permute.xlu0 %939
        %v942 = vsel %vm606, %v938, 0
        %v945 = vsel %vm606, %v940, 0
        %947 = vmatprep.subr.bf16.mxu0 0
        %948 = vmatpush1.bf16.xpose.msra.mxu0 0
        %949 = vmatprep.subr.bf16.mxu0 0
        %950 = vmatpush1.bf16.xpose.msra.mxu0 0
        %951 = vmatprep.subr.bf16.mxu0 0
        %952 = vmatpush1.bf16.xpose.msra.mxu0 0
        %953 = vmatprep.subr.bf16.mxu0 0
        %954 = vmatpush1.bf16.xpose.msra.mxu0 0
        %955 = vmatprep.subr.bf16.mxu0 0
        %956 = vmatpush1.bf16.xpose.msra.mxu0 0
        %957 = vmatprep.subr.bf16.mxu0 0
        %958 = vmatpush1.bf16.xpose.msra.mxu0 0
        %959 = vmatprep.subr.bf16.mxu0 0
        %960 = vmatpush1.bf16.xpose.msra.mxu0 0
        %961 = vmatprep.subr.bf16.mxu0 0
        %962 = vmatpush1.bf16.xpose.msra.mxu0 %v945
        %963 = vmatprep.subr.bf16.mxu0 0
        %964 = vmatpush2.bf16.xpose.msra.mxu0 0
        %965 = vmatprep.subr.bf16.mxu0 0
        %966 = vmatpush2.bf16.xpose.msra.mxu0 0
        %967 = vmatprep.subr.bf16.mxu0 0
        %968 = vmatpush2.bf16.xpose.msra.mxu0 0
        %969 = vmatprep.subr.bf16.mxu0 0
        %970 = vmatpush2.bf16.xpose.msra.mxu0 0
        %971 = vmatprep.subr.bf16.mxu0 0
        %972 = vmatpush2.bf16.xpose.msra.mxu0 0
        %973 = vmatprep.subr.bf16.mxu0 0
        %974 = vmatpush2.bf16.xpose.msra.mxu0 0
        %975 = vmatprep.subr.bf16.mxu0 0
        %976 = vmatpush2.bf16.xpose.msra.mxu0 0
        %977 = vmatprep.subr.bf16.mxu0 0
        %978 = vmatpush2.bf16.xpose.msra.mxu0 0
        %979 = vmatprep.mubr.bf16.mxu0 0
        %980 = vmatmul.mubr.bf16.gmra.mxu0 %v942
        %v981 = vpop.f32.mrf.mxu0
        %v982 = vadd.f32 0.0, %v981
        %v983 = vpop.f32.mrf.mxu0
        %v984 = vpop.f32.mrf.mxu0
        %v985 = vpop.f32.mrf.mxu0
        %986 = vdwg.mxu0
        %v987 = vsel %vm602, %v982, -1e+20
        %v988 = vsel %vm606, %v987, -inf
        %989 = vmax.xlane.f32.xlu0 %v988
        %v990 = vpop.xlane.xlu0 %989
        %v991 = vsub.f32 %v987, %v990
        %v992 = vmul.f32 %v991, 1.442695
        %v993 = vpow.pop %v992
        %v994 = vsel %vm606, %v993, 0.0
        %995 = vadd.xlane.f32.xlu0 %v994
        %v996 = vpop.xlane.xlu0 %995
        %v997 = vrcp.pop %v996
        %v998 = vmul.f32 %v993, %v997
        %v999 = vpack.c.bf16 %v998, %v998
        %1000 = vrot.lane.b32.xlu0 %v598, 40
        %v1001 = vpop.permute.xlu0 %1000
        %v1003 = vsel %vm606, %v999, 0
        %v1006 = vsel %vm671, %v1001, 0
        %1008 = vmatprep.subr.bf16.mxu0 0
        %1009 = vmatpush1.bf16.msra.mxu0 0
        %1010 = vmatprep.subr.bf16.mxu0 0
        %1011 = vmatpush1.bf16.msra.mxu0 0
        %1012 = vmatprep.subr.bf16.mxu0 0
        %1013 = vmatpush1.bf16.msra.mxu0 0
        %1014 = vmatprep.subr.bf16.mxu0 0
        %1015 = vmatpush1.bf16.msra.mxu0 0
        %1016 = vmatprep.subr.bf16.mxu0 0
        %1017 = vmatpush1.bf16.msra.mxu0 0
        %1018 = vmatprep.subr.bf16.mxu0 0
        %1019 = vmatpush1.bf16.msra.mxu0 0
        %1020 = vmatprep.subr.bf16.mxu0 0
        %1021 = vmatpush1.bf16.msra.mxu0 0
        %1022 = vmatprep.subr.bf16.mxu0 0
        %1023 = vmatpush1.bf16.msra.mxu0 %v1006
        %1024 = vmatprep.subr.bf16.mxu0 0
        %1025 = vmatpush2.bf16.msra.mxu0 0
        %1026 = vmatprep.subr.bf16.mxu0 0
        %1027 = vmatpush2.bf16.msra.mxu0 0
        %1028 = vmatprep.subr.bf16.mxu0 0
        %1029 = vmatpush2.bf16.msra.mxu0 0
        %1030 = vmatprep.subr.bf16.mxu0 0
        %1031 = vmatpush2.bf16.msra.mxu0 0
        %1032 = vmatprep.subr.bf16.mxu0 0
        %1033 = vmatpush2.bf16.msra.mxu0 0
        %1034 = vmatprep.subr.bf16.mxu0 0
        %1035 = vmatpush2.bf16.msra.mxu0 0
        %1036 = vmatprep.subr.bf16.mxu0 0
        %1037 = vmatpush2.bf16.msra.mxu0 0
        %1038 = vmatprep.subr.bf16.mxu0 0
        %1039 = vmatpush2.bf16.msra.mxu0 0
        %1040 = vmatprep.mubr.bf16.mxu0 0
        %1041 = vmatmul.mubr.bf16.gmra.mxu0 %v1003
        %v1042 = vpop.f32.mrf.mxu0
        %v1043 = vadd.f32 0.0, %v1042
        %v1044 = vpop.f32.mrf.mxu0
        %v1045 = vpop.f32.mrf.mxu0
        %v1046 = vpop.f32.mrf.mxu0
        %1047 = vdwg.mxu0
        %1049 = vrot.lane.b32.xlu0 %v821, 8
        %v1050 = vpop.permute.xlu0 %1049
        %1053 = vrot.lane.b32.xlu0 %v932, 16
        %v1054 = vpop.permute.xlu0 %1053
        %1057 = vrot.lane.b32.xlu0 %v1043, 24
        %v1058 = vpop.permute.xlu0 %1057
        %v1060 = vsel %vm606, %v710, %v1050
        %vm1061 = vcmask 130048
        %v1062 = vsel %vm1061, %v1060, %v1054
        %vm1063 = vcmask 195584
        %v1064 = vsel %vm1063, %v1062, %v1058
        %v1065 = vpack.c.bf16 %v1064, %v1064
        %v1066 = vld [vmem:[%s5] sm:$0xf]
        %v1067 = vld [vmem:[%s5 + $0x4] sm:$0xf]
        %v1068 = vld [vmem:[%s5 + $0x8] sm:$0xf]
        %v1069 = vld [vmem:[%s5 + $0xc] sm:$0xf]
        %v1074 = vunpack.c.l.b16 %v1066
        %v1075 = vunpack.c.l.b16 %v1067
        %v1076 = vunpack.c.l.b16 %v1068
        %v1077 = vunpack.c.l.b16 %v1069
        %v1078 = vpack.c.b16 %v1075, %v1074
        %v1079 = vpack.c.b16 %v1077, %v1076
        %v1083 = vsel %vm502, %v1065, 0
        %1085 = vmatprep.subr.bf16.mxu0 0
        %1086 = vmatpush1.bf16.msra.mxu0 0
        %1087 = vmatprep.subr.bf16.mxu0 0
        %1088 = vmatpush1.bf16.msra.mxu0 0
        %1089 = vmatprep.subr.bf16.mxu0 0
        %1090 = vmatpush1.bf16.msra.mxu0 0
        %1091 = vmatprep.subr.bf16.mxu0 0
        %1092 = vmatpush1.bf16.msra.mxu0 0
        %1093 = vmatprep.subr.bf16.mxu0 0
        %1094 = vmatpush1.bf16.msra.mxu0 0
        %1095 = vmatprep.subr.bf16.mxu0 0
        %1096 = vmatpush1.bf16.msra.mxu0 0
        %1097 = vmatprep.subr.bf16.mxu0 0
        %1098 = vmatpush1.bf16.msra.mxu0 %v1079
        %1099 = vmatprep.subr.bf16.mxu0 0
        %1100 = vmatpush1.bf16.msra.mxu0 %v1078
        %1101 = vmatprep.subr.bf16.mxu0 0
        %1102 = vmatpush2.bf16.msra.mxu0 0
        %1103 = vmatprep.subr.bf16.mxu0 0
        %1104 = vmatpush2.bf16.msra.mxu0 0
        %1105 = vmatprep.subr.bf16.mxu0 0
        %1106 = vmatpush2.bf16.msra.mxu0 0
        %1107 = vmatprep.subr.bf16.mxu0 0
        %1108 = vmatpush2.bf16.msra.mxu0 0
        %1109 = vmatprep.subr.bf16.mxu0 0
        %1110 = vmatpush2.bf16.msra.mxu0 0
        %1111 = vmatprep.subr.bf16.mxu0 0
        %1112 = vmatpush2.bf16.msra.mxu0 0
        %1113 = vmatprep.subr.bf16.mxu0 0
        %1114 = vmatpush2.bf16.msra.mxu0 0
        %1115 = vmatprep.subr.bf16.mxu0 0
        %1116 = vmatpush2.bf16.msra.mxu0 0
        %1117 = vmatprep.mubr.bf16.mxu0 0
        %1118 = vmatmul.mubr.bf16.gmra.mxu0 %v1083
        %v1119 = vpop.f32.mrf.mxu0
        %v1120 = vadd.f32 0.0, %v1119
        %v1121 = vpop.f32.mrf.mxu0
        %v1122 = vpop.f32.mrf.mxu0
        %v1123 = vpop.f32.mrf.mxu0
        %1124 = vdwg.mxu0
        %v1125 = vadd.f32 %v499, %v1120
        %v1126 = vld [vmem:[#allocation5] sm:$0x1]
        %v1127 = vld [vmem:[#allocation7] sm:$0x1]
        %v1128 = vsel %vm502, %v1125, 0.0
        %1129 = vadd.xlane.f32.xlu0 %v1128
        %v1130 = vpop.xlane.xlu0 %1129
        %v1131 = vmul.f32 %v1130, %v506
        %v1132 = vsub.f32 %v1125, %v1131
        %v1133 = vmul.f32 %v1132, %v1132
        %v1134 = vsel %vm502, %v1133, 0.0
        %1135 = vadd.xlane.f32.xlu0 %v1134
        %v1136 = vpop.xlane.xlu0 %1135
        %v1137 = vmul.f32 %v1136, 0.032258064
        %v1138 = vrsqrt.pop %v1137
        %v1139 = vmul.f32 %v1137, %v1138
        %vm1140 = vcmp.eq.f32.partialorder %v1137, inf
        %v1141 = vsel %vm1140, %v1137, %v1139
        %vm1142 = vcmp.eq.f32.partialorder %v1137, 0.0
        %v1143 = vand.u32 %v1137, 2147483648
        %v1144 = vsel %vm1142, %v1143, %v1141
        %v1145 = vadd.f32 %v1144, 1e-06
        %v1146 = vrcp.pop %v1145
        %v1148 = vlaneseq
        %v1149 = vshrl.u32 %v1148, 7
        %v1150 = vsub.s32 0, %v1149
        %v1151 = vrot.slane %v1126, %v1150
        %v1153 = vmul.f32 %v1151, %v1132
        %v1154 = vmul.f32 %v1153, %v1146
        %v1156 = vlaneseq
        %v1157 = vshrl.u32 %v1156, 7
        %v1158 = vsub.s32 0, %v1157
        %v1159 = vrot.slane %v1127, %v1158
        %v1161 = vadd.f32 %v1154, %v1159
        %v1162 = vld [vmem:[#allocation10] sm:$0x1]
        %v1163 = vld [vmem:[%s11] sm:$0x1]
        %v1164 = vpack.c.bf16 %v1161, %v1161
        %v1165 = vld [vmem:[#allocation8] sm:$0xf]
        %v1166 = vld [vmem:[#allocation8 + $0x4] sm:$0xf]
        %v1167 = vld [vmem:[#allocation8 + $0x8] sm:$0xf]
        %v1168 = vld [vmem:[#allocation8 + $0xc] sm:$0xf]
        %v1170 = vlaneseq
        %v1171 = vshrl.u32 %v1170, 7
        %v1172 = vsub.s32 0, %v1171
        %v1173 = vrot.slane %v1162, %v1172
        %v1179 = vunpack.c.l.b16 %v1165
        %v1180 = vunpack.c.l.b16 %v1166
        %v1181 = vunpack.c.l.b16 %v1167
        %v1182 = vunpack.c.l.b16 %v1168
        %v1183 = vpack.c.b16 %v1180, %v1179
        %v1184 = vpack.c.b16 %v1182, %v1181
        %v1188 = vsel %vm502, %v1164, 0
        %1190 = vmatprep.subr.bf16.mxu0 0
        %1191 = vmatpush1.bf16.msra.mxu0 0
        %1192 = vmatprep.subr.bf16.mxu0 0
        %1193 = vmatpush1.bf16.msra.mxu0 0
        %1194 = vmatprep.subr.bf16.mxu0 0
        %1195 = vmatpush1.bf16.msra.mxu0 0
        %1196 = vmatprep.subr.bf16.mxu0 0
        %1197 = vmatpush1.bf16.msra.mxu0 0
        %1198 = vmatprep.subr.bf16.mxu0 0
        %1199 = vmatpush1.bf16.msra.mxu0 0
        %1200 = vmatprep.subr.bf16.mxu0 0
        %1201 = vmatpush1.bf16.msra.mxu0 0
        %1202 = vmatprep.subr.bf16.mxu0 0
        %1203 = vmatpush1.bf16.msra.mxu0 %v1184
        %1204 = vmatprep.subr.bf16.mxu0 0
        %1205 = vmatpush1.bf16.msra.mxu0 %v1183
        %1206 = vmatprep.subr.bf16.mxu0 0
        %1207 = vmatpush2.bf16.msra.mxu0 0
        %1208 = vmatprep.subr.bf16.mxu0 0
        %1209 = vmatpush2.bf16.msra.mxu0 0
        %1210 = vmatprep.subr.bf16.mxu0 0
        %1211 = vmatpush2.bf16.msra.mxu0 0
        %1212 = vmatprep.subr.bf16.mxu0 0
        %1213 = vmatpush2.bf16.msra.mxu0 0
        %1214 = vmatprep.subr.bf16.mxu0 0
        %1215 = vmatpush2.bf16.msra.mxu0 0
        %1216 = vmatprep.subr.bf16.mxu0 0
        %1217 = vmatpush2.bf16.msra.mxu0 0
        %1218 = vmatprep.subr.bf16.mxu0 0
        %1219 = vmatpush2.bf16.msra.mxu0 0
        %1220 = vmatprep.subr.bf16.mxu0 0
        %1221 = vmatpush2.bf16.msra.mxu0 0
        %1222 = vmatprep.mubr.bf16.mxu0 0
        %1223 = vmatmul.mubr.bf16.gmra.mxu0 %v1188
        %v1224 = vpop.f32.mrf.mxu0
        %v1225 = vadd.f32 %v1173, %v1224
        %v1226 = vpop.f32.mrf.mxu0
        %v1227 = vpop.f32.mrf.mxu0
        %v1228 = vpop.f32.mrf.mxu0
        %1229 = vdwg.mxu0
        %v1230 = vmax.f32 %v1225, 0.0
        %v1231 = vpack.c.bf16 %v1230, %v1230
        %v1232 = vld [vmem:[%s10] sm:$0xf]
        %v1233 = vld [vmem:[%s10 + $0x4] sm:$0xf]
        %v1234 = vld [vmem:[%s10 + $0x8] sm:$0xf]
        %v1235 = vld [vmem:[%s10 + $0xc] sm:$0xf]
        %v1236 = vld [vmem:[%s10 + $0x10] sm:$0xf]
        %v1237 = vld [vmem:[%s10 + $0x14] sm:$0xf]
        %v1238 = vld [vmem:[%s10 + $0x18] sm:$0xf]
        %v1239 = vld [vmem:[%s10 + $0x1c] sm:$0xf]
        %v1241 = vlaneseq
        %v1242 = vshrl.u32 %v1241, 7
        %v1243 = vsub.s32 0, %v1242
        %v1244 = vrot.slane %v1163, %v1243
        %v1254 = vunpack.c.l.b16 %v1232
        %v1255 = vunpack.c.l.b16 %v1233
        %v1256 = vunpack.c.l.b16 %v1234
        %v1257 = vunpack.c.l.b16 %v1235
        %v1258 = vunpack.c.l.b16 %v1236
        %v1259 = vunpack.c.l.b16 %v1237
        %v1260 = vunpack.c.l.b16 %v1238
        %v1261 = vunpack.c.l.b16 %v1239
        %v1262 = vpack.c.b16 %v1255, %v1254
        %v1263 = vpack.c.b16 %v1257, %v1256
        %v1264 = vpack.c.b16 %v1259, %v1258
        %v1265 = vpack.c.b16 %v1261, %v1260
        %vm1270 = vcmask 523264
        %v1272 = vsel %vm1270, %v1231, 0
        %1274 = vmatprep.subr.bf16.mxu0 0
        %1275 = vmatpush1.bf16.msra.mxu0 0
        %1276 = vmatprep.subr.bf16.mxu0 0
        %1277 = vmatpush1.bf16.msra.mxu0 0
        %1278 = vmatprep.subr.bf16.mxu0 0
        %1279 = vmatpush1.bf16.msra.mxu0 0
        %1280 = vmatprep.subr.bf16.mxu0 0
        %1281 = vmatpush1.bf16.msra.mxu0 0
        %1282 = vmatprep.subr.bf16.mxu0 0
        %1283 = vmatpush1.bf16.msra.mxu0 %v1265
        %1284 = vmatprep.subr.bf16.mxu0 0
        %1285 = vmatpush1.bf16.msra.mxu0 %v1264
        %1286 = vmatprep.subr.bf16.mxu0 0
        %1287 = vmatpush1.bf16.msra.mxu0 %v1263
        %1288 = vmatprep.subr.bf16.mxu0 0
        %1289 = vmatpush1.bf16.msra.mxu0 %v1262
        %1290 = vmatprep.subr.bf16.mxu0 0
        %1291 = vmatpush2.bf16.msra.mxu0 0
        %1292 = vmatprep.subr.bf16.mxu0 0
        %1293 = vmatpush2.bf16.msra.mxu0 0
        %1294 = vmatprep.subr.bf16.mxu0 0
        %1295 = vmatpush2.bf16.msra.mxu0 0
        %1296 = vmatprep.subr.bf16.mxu0 0
        %1297 = vmatpush2.bf16.msra.mxu0 0
        %1298 = vmatprep.subr.bf16.mxu0 0
        %1299 = vmatpush2.bf16.msra.mxu0 0
        %1300 = vmatprep.subr.bf16.mxu0 0
        %1301 = vmatpush2.bf16.msra.mxu0 0
        %1302 = vmatprep.subr.bf16.mxu0 0
        %1303 = vmatpush2.bf16.msra.mxu0 0
        %1304 = vmatprep.subr.bf16.mxu0 0
        %1305 = vmatpush2.bf16.msra.mxu0 0
        %1306 = vmatprep.mubr.bf16.mxu0 0
        %1307 = vmatmul.mubr.bf16.gmra.mxu0 %v1272
        %v1308 = vpop.f32.mrf.mxu0
        %v1309 = vadd.f32 %v1244, %v1308
        %v1310 = vpop.f32.mrf.mxu0
        %v1311 = vpop.f32.mrf.mxu0
        %v1312 = vpop.f32.mrf.mxu0
        %1313 = vdwg.mxu0
        %v1314 = vadd.f32 %v1125, %v1309
        %1315 = vst.msk [vmem:[%s493] sm:$0xff] %vm502, %v1314
        %s1316 = sand.u32 %s301, 1
        %s1317 = scalar_lea.sflag [#allocation4], %s1316
        %s1318 = sand.u32 %s301, 1
        %s1319 = smul.addr %s1318, 8
        %s1320 = scalar_lea.vmem [#allocation11], %s1319
        // Predicated region
        $region89: #{tpu_custom_call.1} parent=67 // pred_check
          %p1321 = pneg %p311
        $region90: #{tpu_custom_call.1} parent=67 // pred_check_branch
          %1323 = sbr.rel (%p1321) target = $region92
        $region91: #{tpu_custom_call.1} parent=67 // pred_region
          %s1325 = ssub.s32 128, 128
          %1326 = vsyncadd %s1317, %s1325
          %s1327 = smul.addr %s31, 128
          %s1328 = scalar_lea.hbm %s12, %s1327
          %s1330 = sshll.u32 %s1320, 4
          %s1331 = int_to_ptr.vmem [resolvable:$true] %s1330
          %1333 = dma.vmem_to_hbm [thread:$0]  %s1331, 128, %s1328, %s1317
        $region92: #{tpu_custom_call.1} parent=67 // pred_fallthru
          _
      $region68: #{tpu_custom_call.1} parent=5 // pred_fallthru
        _
      %p1334 = scmp.le.s32.totalorder 2, %s26
      // Predicated region
      $region93: #{tpu_custom_call.1} parent=5 // pred_check
        %p1335 = pneg %p1334
      $region94: #{tpu_custom_call.1} parent=5 // pred_check_branch
        %1337 = sbr.rel (%p1335) target = $region96
      $region95: #{tpu_custom_call.1} parent=5 // pred_region
        %s1338 = ssub.s32 %s26, 2
        // Predicated region
        $region97: #{tpu_custom_call.1} parent=95 // pred_check
          %p1339 = pneg %p317
        $region98: #{tpu_custom_call.1} parent=95 // pred_check_branch
          %1341 = sbr.rel (%p1339) target = $region100
        $region99: #{tpu_custom_call.1} parent=95 // pred_region
          %s1342 = sand.u32 %s302, 1
          %s1343 = scalar_lea.sflag [#allocation4], %s1342
          %s1344 = sand.u32 %s302, 1
          %s1345 = smul.addr %s1344, 8
          %s1346 = scalar_lea.vmem [#allocation11], %s1345
          %1347 = dma.done %s1343, 128
        $region100: #{tpu_custom_call.1} parent=95 // pred_fallthru
          _
      $region96: #{tpu_custom_call.1} parent=5 // pred_fallthru
        _
    $region6: #{tpu_custom_call.1} parent=1 // loop_footer
      %s30 = sadd.s32 1, %s26
    $region7: #{tpu_custom_call.1} parent=1 // loop_footer_branch
      %25 = sbr.rel target = $region3
    $region8: #{tpu_custom_call.1} parent=1 // loop_exit
      _
    %1348 = vsyncpa [#allocation3], 1
    %s1349 = scalar_lea.sflag [#allocation3], 1
    %1350 = vsyncpa %s1349, 1
    %1351 = vsyncpa [#allocation6], 1
    %1352 = vsyncpa [#allocation9], 1
    %1353 = vsyncpa [#allocation4], 1
    %s1354 = scalar_lea.sflag [#allocation4], 1
    %1355 = vsyncpa %s1354, 1

</llo_original>
